<compile_context>
chip_gen: v5e
topology: v5e:2x2
jax: 0.10.0
libtpu: 0.0.40
codegen_flags: <defaults>
</compile_context>

<pallas_src>
import functools

import jax
import jax.numpy as jnp
from jax.experimental import pallas as pl
from jax.experimental.pallas import tpu as pltpu


def _tmm_block_kernel(x_ref, w1_ref, b1_ref, w2_ref, b2_ref, w3_ref, b3_ref,
                      o_ref, *, c_tile, d):
    """One grid step == one block of `c_tile` classifier heads."""
    x = x_ref[...]                                                # (Bp, H) bf16

    # ----- Layer 1, fused across the class block (MXU, lane-dense N) -------
    h1 = jnp.dot(x, w1_ref[0], preferred_element_type=jnp.float32)
    h1 = jnp.maximum(h1 + b1_ref[0], 0.0)                         # (Bp, c_tile*D) f32
    # Dropout = identity (eval mode).  Single cast, hoisted out of the loop.
    h1b = h1.astype(jnp.bfloat16)

    # ----- Layer 2: per-class matmuls, N = D lanes (lane-dense) ------------
    h2_parts = []
    for t in range(c_tile):
        h1_t = h1b[:, t * d:(t + 1) * d]                          # lane-aligned slice
        h2_parts.append(jnp.dot(h1_t, w2_ref[t],
                                preferred_element_type=jnp.float32))
    h2 = jnp.concatenate(h2_parts, axis=-1)                       # (Bp, c_tile*D) f32
    h2 = jnp.maximum(h2 + b2_ref[0], 0.0).astype(jnp.bfloat16)

    # ----- Layer 3, fused block-diagonal matmul -----------------------------
    # (Bp, c_tile*D) @ (c_tile*D, c_tile*2) -> one lane-contiguous slab.
    out = jnp.dot(h2, w3_ref[0], preferred_element_type=jnp.float32) + b3_ref[0]
    o_ref[0] = out.astype(o_ref.dtype)


def _round_up(x, m):
    return (x + m - 1) // m * m


def _num_tensorcores():
    """Best-effort TensorCore-per-device count (v4/v5p megacore, v7x = 2)."""
    try:
        kind = (jax.devices()[0].device_kind or "").lower()
    except Exception:
        return 1
    if ("v4" in kind) or ("v5p" in kind) or ("7" in kind):
        return 2
    return 1


def _vmem_estimate_bytes(b_pad, h, d, c_tile):
    """Rough double-buffered VMEM footprint of one grid step."""
    lane = 128
    w1 = h * c_tile * d * 2                                   # bf16
    w2 = c_tile * d * d * 2
    w3 = (c_tile * d) * _round_up(c_tile * 2, lane) * 2       # lane padding
    bias = 3 * 8 * _round_up(c_tile * d, lane) * 4            # sublane padding
    x = b_pad * h * 2
    out = b_pad * _round_up(c_tile * 2, lane) * 4
    inter = 6 * b_pad * c_tile * d * 4                        # h1/h2/temps f32
    return 2 * (w1 + w2 + w3 + bias + x + out) + inter


def _pick_c_tile(c, b_pad, h, d, num_cores, vmem_budget):
    c_tile = 1
    for cand in (64, 32, 16, 8, 4, 2, 1):                     # even => c_tile*D % 256 == 0
        if _vmem_estimate_bytes(b_pad, h, d, cand) <= vmem_budget:
            c_tile = cand
            break
    if c_tile >= c:
        c_tile = c                                            # one block covers all heads
    if num_cores > 1:
        # keep >= num_cores grid steps so ("parallel",) shards across TensorCores
        while c_tile > 1 and pl.cdiv(c, c_tile) < num_cores:
            c_tile = max(1, c_tile // 2)
    return c_tile


def tmm_forward(x, w1, b1, w2, b2, w3, b3, *, c_tile=None):
    """x: (B, 768) pooled doc representation.

    w1: (C, 768, D), b1: (C, 1, D), w2: (C, D, D), b2: (C, 1, D),
    w3: (C, D, 2),   b3: (C, 1, 2).
    Returns logits of shape (B, C, 2), matching torch.stack(outputs, dim=1).
    """
    B, H = x.shape
    C, _, D = w1.shape

    # ---- tiling choices -----------------------------------------------------
    B_pad = max(8, _round_up(B, 8))                       # sublane-aligned batch
    num_cores = _num_tensorcores()
    vmem_budget = 40 * 1024 * 1024
    if c_tile is None:
        c_tile = _pick_c_tile(C, B_pad, H, D, num_cores, vmem_budget)
    C_pad = _round_up(C, c_tile)                          # zero-pad awkward C
    num_blocks = C_pad // c_tile

    # ---- operand preparation (bf16 streaming, per-block contiguous layouts) -
    def pad_c(a):
        if C_pad == C:
            return a
        return jnp.pad(a, ((0, C_pad - C),) + ((0, 0),) * (a.ndim - 1))

    w1p, b1p, w2p, b2p, w3p, b3p = (pad_c(a) for a in (w1, b1, w2, b2, w3, b3))

    xb = x
    if B_pad != B:
        xb = jnp.pad(xb, ((0, B_pad - B), (0, 0)))
    xb = xb.astype(jnp.bfloat16)

    # W1: (C,H,D) -> (num_blocks, H, c_tile*D): contiguous DMA per grid step.
    w1f = (w1p.reshape(num_blocks, c_tile, H, D)
              .transpose(0, 2, 1, 3)
              .reshape(num_blocks, H, c_tile * D)
              .astype(jnp.bfloat16))
    b1f = b1p.reshape(num_blocks, 1, c_tile * D).astype(jnp.float32)

    # W2: (C,D,D) bf16, blocked along the class axis (contiguous per block).
    w2b = w2p.astype(jnp.bfloat16)
    b2f = b2p.reshape(num_blocks, 1, c_tile * D).astype(jnp.float32)

    # W3: block-diagonal (num_blocks, c_tile*D, c_tile*2) so layer 3 is one
    # lane-contiguous matmul per block.
    eye = jnp.eye(c_tile, dtype=w3p.dtype)
    w3bd = (w3p.reshape(num_blocks, c_tile, D, 2)[:, :, :, None, :]
            * eye[None, :, None, :, None])
    w3bd = w3bd.reshape(num_blocks, c_tile * D, c_tile * 2).astype(jnp.bfloat16)
    b3f = b3p.reshape(num_blocks, 1, c_tile * 2).astype(jnp.float32)

    flops = 2 * B_pad * C_pad * (H * D + D * D + D * 2)
    bytes_accessed = int(xb.nbytes + w1f.nbytes + b1f.nbytes + w2b.nbytes +
                         b2f.nbytes + w3bd.nbytes + b3f.nbytes +
                         num_blocks * B_pad * c_tile * 2 * 4)

    vmem_limit = int(max(32 * 1024 * 1024,
                         min(48 * 1024 * 1024,
                             _vmem_estimate_bytes(B_pad, H, D, c_tile)
                             + 8 * 1024 * 1024)))

    kernel = functools.partial(_tmm_block_kernel, c_tile=c_tile, d=D)

    out_blocks = pl.pallas_call(
        kernel,
        out_shape=jax.ShapeDtypeStruct((num_blocks, B_pad, c_tile * 2),
                                       jnp.float32),
        grid_spec=pltpu.PrefetchScalarGridSpec(
            num_scalar_prefetch=0,
            grid=(num_blocks,),
            in_specs=[
                pl.BlockSpec((B_pad, H), lambda g: (0, 0)),                  # x (shared)
                pl.BlockSpec((1, H, c_tile * D), lambda g: (g, 0, 0)),       # W1 fused
                pl.BlockSpec((1, 1, c_tile * D), lambda g: (g, 0, 0)),       # b1 fused
                pl.BlockSpec((c_tile, D, D), lambda g: (g, 0, 0)),           # W2 block
                pl.BlockSpec((1, 1, c_tile * D), lambda g: (g, 0, 0)),       # b2 fused
                pl.BlockSpec((1, c_tile * D, c_tile * 2), lambda g: (g, 0, 0)),  # W3 blkdiag
                pl.BlockSpec((1, 1, c_tile * 2), lambda g: (g, 0, 0)),       # b3 fused
            ],
            out_specs=pl.BlockSpec((1, B_pad, c_tile * 2), lambda g: (g, 0, 0)),
        ),
        compiler_params=pltpu.CompilerParams(
            dimension_semantics=("parallel",),
            vmem_limit_bytes=vmem_limit),
        cost_estimate=pl.CostEstimate(
            flops=flops, transcendentals=0, bytes_accessed=bytes_accessed),
    )(xb, w1f, b1f, w2b, b2f, w3bd, b3f)

    # (num_blocks, B_pad, c_tile*2) -> (B, C, 2), matching torch.stack(dim=1).
    out = jnp.transpose(out_blocks, (1, 0, 2)).reshape(B_pad, C_pad, 2)
    return out[:B, :C]


if __name__ == "__main__":
    key = jax.random.PRNGKey(0)

    # Small shapes consistent with the module:
    B = 2              # batch
    H = 768            # BERT hidden size (fixed by nn.Linear(768, ...))
    D = 128            # dense_layer_size
    C = 4              # num_classes

    keys = jax.random.split(key, 8)
    x = jax.random.normal(keys[0], (B, H), dtype=jnp.float32)

    # Deterministic synthetic parameters (scaled so activations stay sane).
    w1 = jax.random.normal(keys[1], (C, H, D), dtype=jnp.float32) * 0.02
    b1 = jax.random.normal(keys[2], (C, 1, D), dtype=jnp.float32) * 0.02
    w2 = jax.random.normal(keys[3], (C, D, D), dtype=jnp.float32) * 0.02
    b2 = jax.random.normal(keys[4], (C, 1, D), dtype=jnp.float32) * 0.02
    w3 = jax.random.normal(keys[5], (C, D, 2), dtype=jnp.float32) * 0.02
    b3 = jax.random.normal(keys[6], (C, 1, 2), dtype=jnp.float32) * 0.02

    out = tmm_forward(x, w1, b1, w2, b2, w3, b3)
    out = jax.block_until_ready(out)
    assert out.shape == (B, C, 2), out.shape

    # Pure-JAX reference with the same bf16 operand / f32 accumulation recipe.
    def ref(x, w1, b1, w2, b2, w3, b3):
        xb = x.astype(jnp.bfloat16)
        w1b, w2b, w3b = (w.astype(jnp.bfloat16) for w in (w1, w2, w3))
        h1 = jnp.maximum(
            jnp.einsum("bh,chd->cbd", xb, w1b,
                       preferred_element_type=jnp.float32) + b1, 0.0)
        h2 = jnp.maximum(
            jnp.einsum("cbd,cde->cbe", h1.astype(jnp.bfloat16), w2b,
                       preferred_element_type=jnp.float32) + b2, 0.0)
        o = jnp.einsum("cbd,cdk->cbk", h2.astype(jnp.bfloat16), w3b,
                       preferred_element_type=jnp.float32) + b3
        return jnp.transpose(o, (1, 0, 2))

    expected = ref(x, w1, b1, w2, b2, w3, b3)
    assert jnp.allclose(out, expected, atol=2e-2, rtol=2e-2), (
        float(jnp.max(jnp.abs(out - expected))))

    print("KERNEL_OK")
</pallas_src>

<mosaic_0001>
module attributes {stable_mosaic.version = 11 : i64} {
  func.func @_tmm_block_kernel(%arg0: i32, %arg1: memref<8x768xbf16, #tpu.memory_space<vmem>>, %arg2: memref<1x768x512xbf16, #tpu.memory_space<vmem>>, %arg3: memref<1x1x512xf32, #tpu.memory_space<vmem>>, %arg4: memref<4x128x128xbf16, #tpu.memory_space<vmem>>, %arg5: memref<1x1x512xf32, #tpu.memory_space<vmem>>, %arg6: memref<1x512x8xbf16, #tpu.memory_space<vmem>>, %arg7: memref<1x1x8xf32, #tpu.memory_space<vmem>>, %arg8: memref<1x8x8xf32, #tpu.memory_space<vmem>>) attributes {dimension_semantics = [#tpu.dimension_semantics<parallel>], iteration_bounds = array<i64: 1>, scalar_prefetch = 0 : i64, scratch_operands = 0 : i64, tpu.core_type = #tpu.core_type<tc>, window_params = [{pipeline_mode = #tpu.pipeline_mode<synchronous>, transform_indices = @transform_0, window_bounds = array<i64: 8, 768>}, {transform_indices = @transform_1, window_bounds = array<i64: 1, 768, 512>}, {transform_indices = @transform_2, window_bounds = array<i64: 1, 1, 512>}, {transform_indices = @transform_3, window_bounds = array<i64: 4, 128, 128>}, {transform_indices = @transform_4, window_bounds = array<i64: 1, 1, 512>}, {transform_indices = @transform_5, window_bounds = array<i64: 1, 512, 8>}, {transform_indices = @transform_6, window_bounds = array<i64: 1, 1, 8>}, {transform_indices = @transform_7, window_bounds = array<i64: 1, 8, 8>}]} {
    %c0 = arith.constant 0 : index
    %c0_0 = arith.constant 0 : index
    %0 = vector.load %arg1[%c0, %c0_0] : memref<8x768xbf16, #tpu.memory_space<vmem>>, vector<8x768xbf16>
    %c0_1 = arith.constant 0 : index
    %c0_2 = arith.constant 0 : index
    %c0_3 = arith.constant 0 : index
    %1 = vector.load %arg2[%c0_1, %c0_2, %c0_3] : memref<1x768x512xbf16, #tpu.memory_space<vmem>>, vector<1x768x512xbf16>
    %2 = vector.shape_cast %1 : vector<1x768x512xbf16> to vector<768x512xbf16>
    %cst = arith.constant dense<0.000000e+00> : vector<8x512xf32>
    %3 = tpu.matmul %0, %2, %cst {dimension_numbers = #tpu.dot_dimension_numbers<[1], [0], [0], [1], [0, 0, 1, 1], [], []>} : vector<8x768xbf16>, vector<768x512xbf16>, vector<8x512xf32> -> vector<8x512xf32>
    %c0_4 = arith.constant 0 : index
    %c0_5 = arith.constant 0 : index
    %c0_6 = arith.constant 0 : index
    %4 = vector.load %arg3[%c0_4, %c0_5, %c0_6] : memref<1x1x512xf32, #tpu.memory_space<vmem>>, vector<1x1x512xf32>
    %5 = vector.shape_cast %4 : vector<1x1x512xf32> to vector<1x512xf32>
    %6 = vector.broadcast %5 : vector<1x512xf32> to vector<8x512xf32>
    %7 = arith.addf %3, %6 : vector<8x512xf32>
    %cst_7 = arith.constant 0.000000e+00 : f32
    %8 = vector.broadcast %cst_7 : f32 to vector<8x512xf32>
    %9 = arith.maximumf %7, %8 : vector<8x512xf32>
    %10 = arith.truncf %9 : vector<8x512xf32> to vector<8x512xbf16>
    %11 = vector.extract_strided_slice %10 {offsets = [0, 0], sizes = [8, 128], strides = [1, 1]} : vector<8x512xbf16> to vector<8x128xbf16>
    %c0_8 = arith.constant 0 : index
    %c0_9 = arith.constant 0 : index
    %c0_10 = arith.constant 0 : index
    %12 = vector.load %arg4[%c0_8, %c0_9, %c0_10] : memref<4x128x128xbf16, #tpu.memory_space<vmem>>, vector<1x128x128xbf16>
    %13 = vector.shape_cast %12 : vector<1x128x128xbf16> to vector<128x128xbf16>
    %cst_11 = arith.constant dense<0.000000e+00> : vector<8x128xf32>
    %14 = tpu.matmul %11, %13, %cst_11 {dimension_numbers = #tpu.dot_dimension_numbers<[1], [0], [0], [1], [0, 0, 1, 1], [], []>} : vector<8x128xbf16>, vector<128x128xbf16>, vector<8x128xf32> -> vector<8x128xf32>
    %15 = vector.extract_strided_slice %10 {offsets = [0, 128], sizes = [8, 128], strides = [1, 1]} : vector<8x512xbf16> to vector<8x128xbf16>
    %c1 = arith.constant 1 : index
    %c0_12 = arith.constant 0 : index
    %c0_13 = arith.constant 0 : index
    %16 = vector.load %arg4[%c1, %c0_12, %c0_13] : memref<4x128x128xbf16, #tpu.memory_space<vmem>>, vector<1x128x128xbf16>
    %17 = vector.shape_cast %16 : vector<1x128x128xbf16> to vector<128x128xbf16>
    %cst_14 = arith.constant dense<0.000000e+00> : vector<8x128xf32>
    %18 = tpu.matmul %15, %17, %cst_14 {dimension_numbers = #tpu.dot_dimension_numbers<[1], [0], [0], [1], [0, 0, 1, 1], [], []>} : vector<8x128xbf16>, vector<128x128xbf16>, vector<8x128xf32> -> vector<8x128xf32>
    %19 = vector.extract_strided_slice %10 {offsets = [0, 256], sizes = [8, 128], strides = [1, 1]} : vector<8x512xbf16> to vector<8x128xbf16>
    %c2 = arith.constant 2 : index
    %c0_15 = arith.constant 0 : index
    %c0_16 = arith.constant 0 : index
    %20 = vector.load %arg4[%c2, %c0_15, %c0_16] : memref<4x128x128xbf16, #tpu.memory_space<vmem>>, vector<1x128x128xbf16>
    %21 = vector.shape_cast %20 : vector<1x128x128xbf16> to vector<128x128xbf16>
    %cst_17 = arith.constant dense<0.000000e+00> : vector<8x128xf32>
    %22 = tpu.matmul %19, %21, %cst_17 {dimension_numbers = #tpu.dot_dimension_numbers<[1], [0], [0], [1], [0, 0, 1, 1], [], []>} : vector<8x128xbf16>, vector<128x128xbf16>, vector<8x128xf32> -> vector<8x128xf32>
    %23 = vector.extract_strided_slice %10 {offsets = [0, 384], sizes = [8, 128], strides = [1, 1]} : vector<8x512xbf16> to vector<8x128xbf16>
    %c3 = arith.constant 3 : index
    %c0_18 = arith.constant 0 : index
    %c0_19 = arith.constant 0 : index
    %24 = vector.load %arg4[%c3, %c0_18, %c0_19] : memref<4x128x128xbf16, #tpu.memory_space<vmem>>, vector<1x128x128xbf16>
    %25 = vector.shape_cast %24 : vector<1x128x128xbf16> to vector<128x128xbf16>
    %cst_20 = arith.constant dense<0.000000e+00> : vector<8x128xf32>
    %26 = tpu.matmul %23, %25, %cst_20 {dimension_numbers = #tpu.dot_dimension_numbers<[1], [0], [0], [1], [0, 0, 1, 1], [], []>} : vector<8x128xbf16>, vector<128x128xbf16>, vector<8x128xf32> -> vector<8x128xf32>
    %27 = tpu.concatenate %14, %18, %22, %26 in 1 : vector<8x128xf32>, vector<8x128xf32>, vector<8x128xf32>, vector<8x128xf32> -> vector<8x512xf32>
    %c0_21 = arith.constant 0 : index
    %c0_22 = arith.constant 0 : index
    %c0_23 = arith.constant 0 : index
    %28 = vector.load %arg5[%c0_21, %c0_22, %c0_23] : memref<1x1x512xf32, #tpu.memory_space<vmem>>, vector<1x1x512xf32>
    %29 = vector.shape_cast %28 : vector<1x1x512xf32> to vector<1x512xf32>
    %30 = vector.broadcast %29 : vector<1x512xf32> to vector<8x512xf32>
    %31 = arith.addf %27, %30 : vector<8x512xf32>
    %cst_24 = arith.constant 0.000000e+00 : f32
    %32 = vector.broadcast %cst_24 : f32 to vector<8x512xf32>
    %33 = arith.maximumf %31, %32 : vector<8x512xf32>
    %34 = arith.truncf %33 : vector<8x512xf32> to vector<8x512xbf16>
    %c0_25 = arith.constant 0 : index
    %c0_26 = arith.constant 0 : index
    %c0_27 = arith.constant 0 : index
    %35 = vector.load %arg6[%c0_25, %c0_26, %c0_27] : memref<1x512x8xbf16, #tpu.memory_space<vmem>>, vector<1x512x8xbf16>
    %36 = vector.shape_cast %35 : vector<1x512x8xbf16> to vector<512x8xbf16>
    %cst_28 = arith.constant dense<0.000000e+00> : vector<8x8xf32>
    %37 = tpu.matmul %34, %36, %cst_28 {dimension_numbers = #tpu.dot_dimension_numbers<[1], [0], [0], [1], [0, 0, 1, 1], [], []>} : vector<8x512xbf16>, vector<512x8xbf16>, vector<8x8xf32> -> vector<8x8xf32>
    %c0_29 = arith.constant 0 : index
    %c0_30 = arith.constant 0 : index
    %c0_31 = arith.constant 0 : index
    %38 = vector.load %arg7[%c0_29, %c0_30, %c0_31] : memref<1x1x8xf32, #tpu.memory_space<vmem>>, vector<1x1x8xf32>
    %39 = vector.shape_cast %38 : vector<1x1x8xf32> to vector<1x8xf32>
    %40 = vector.broadcast %39 : vector<1x8xf32> to vector<8x8xf32>
    %41 = arith.addf %37, %40 : vector<8x8xf32>
    %c0_32 = arith.constant 0 : index
    %c0_33 = arith.constant 0 : index
    %c0_34 = arith.constant 0 : index
    %42 = vector.load %arg8[%c0_32, %c0_33, %c0_34] : memref<1x8x8xf32, #tpu.memory_space<vmem>>, vector<1x8x8xf32>
    %43 = vector.shape_cast %42 : vector<1x8x8xf32> to vector<8x8xf32>
    %44 = vector.shape_cast %41 : vector<8x8xf32> to vector<1x8x8xf32>
    tpu.vector_store %arg8[%c0_32, %c0_33, %c0_34], %44 {strides = array<i32>} : memref<1x8x8xf32, #tpu.memory_space<vmem>>, vector<1x8x8xf32>,
    return
  }
  func.func @transform_0(%arg0: i32) -> (i32, i32) {
    %c0_i32 = arith.constant 0 : i32
    %c0_i32_0 = arith.constant 0 : i32
    %c0_i32_1 = arith.constant 0 : i32
    return %c0_i32, %c0_i32_0 : i32, i32
  }
  func.func @transform_1(%arg0: i32) -> (i32, i32, i32) {
    %c0_i32 = arith.constant 0 : i32
    %c0_i32_0 = arith.constant 0 : i32
    %c0_i32_1 = arith.constant 0 : i32
    return %arg0, %c0_i32, %c0_i32_0 : i32, i32, i32
  }
  func.func @transform_2(%arg0: i32) -> (i32, i32, i32) {
    %c0_i32 = arith.constant 0 : i32
    %c0_i32_0 = arith.constant 0 : i32
    %c0_i32_1 = arith.constant 0 : i32
    return %arg0, %c0_i32, %c0_i32_0 : i32, i32, i32
  }
  func.func @transform_3(%arg0: i32) -> (i32, i32, i32) {
    %c0_i32 = arith.constant 0 : i32
    %c0_i32_0 = arith.constant 0 : i32
    %c0_i32_1 = arith.constant 0 : i32
    return %arg0, %c0_i32, %c0_i32_0 : i32, i32, i32
  }
  func.func @transform_4(%arg0: i32) -> (i32, i32, i32) {
    %c0_i32 = arith.constant 0 : i32
    %c0_i32_0 = arith.constant 0 : i32
    %c0_i32_1 = arith.constant 0 : i32
    return %arg0, %c0_i32, %c0_i32_0 : i32, i32, i32
  }
  func.func @transform_5(%arg0: i32) -> (i32, i32, i32) {
    %c0_i32 = arith.constant 0 : i32
    %c0_i32_0 = arith.constant 0 : i32
    %c0_i32_1 = arith.constant 0 : i32
    return %arg0, %c0_i32, %c0_i32_0 : i32, i32, i32
  }
  func.func @transform_6(%arg0: i32) -> (i32, i32, i32) {
    %c0_i32 = arith.constant 0 : i32
    %c0_i32_0 = arith.constant 0 : i32
    %c0_i32_1 = arith.constant 0 : i32
    return %arg0, %c0_i32, %c0_i32_0 : i32, i32, i32
  }
  func.func @transform_7(%arg0: i32) -> (i32, i32, i32) {
    %c0_i32 = arith.constant 0 : i32
    %c0_i32_0 = arith.constant 0 : i32
    %c0_i32_1 = arith.constant 0 : i32
    return %arg0, %c0_i32, %c0_i32_0 : i32, i32, i32
  }
}

</mosaic_0001>

<llo_original>
// kernel: tpu_custom_call.1
$region0: #{tpu_custom_call.1}
  #allocation0 [shape = 'u32[]', space=smem, size = 0x4, offset = 0x4, fixed_abs, tag = 'smem constant byte address 0x4 - core index']
  #allocation1 [shape = 'u32[72,128]{1,0:T(1,128)}', space=vmem, size = 0x9000, scoped, tag = 'internal scratch']
  %s0 = inlined_call_operand.hbm [shape: bf16[8,768], index: 0, kind: input, shape index: {}]
  %s1 = inlined_call_operand.hbm [shape: bf16[1,768,512], index: 1, kind: input, shape index: {}]
  %s2 = inlined_call_operand.vmem [shape: f32[1,1,512], index: 2, kind: input, shape index: {}]
  %s3 = inlined_call_operand.vmem [shape: bf16[4,128,128], index: 3, kind: input, shape index: {}]
  %s4 = inlined_call_operand.vmem [shape: f32[1,1,512], index: 4, kind: input, shape index: {}]
  %s5 = inlined_call_operand.vmem [shape: bf16[1,512,8], index: 5, kind: input, shape index: {}]
  %s6 = inlined_call_operand.vmem [shape: f32[1,1,8], index: 6, kind: input, shape index: {}]
  %s7 = inlined_call_operand.hbm [shape: f32[1,8,8], index: 7, kind: output, shape index: {}]
  %s8 = sld [smem:[#allocation0]]
  $region46: #{tpu_custom_call.1} parent=0
    _
  %s10 = ssub.s32 1, %s8
  %s11 = scalar_select 0, %s10, %s8
  $region1: #{tpu_custom_call.1} parent=0
    #allocation2 [shape = 'u8[12288]{0}', space=vmem, size = 0x3000, scoped, tag = 'input window, operand 0, single buffered']
    #allocation3 [shape = 's32[1]{0}', space=sflag, size = 0x4, scoped, tag = 'scoped memory for tpu_custom_call.1']
    #allocation4 [shape = 's32[1]{0}', space=sflag, size = 0x4, scoped, tag = 'scoped memory for tpu_custom_call.1']
    #allocation5 [shape = 'u8[786432]{0}', space=vmem, size = 0xc0000, scoped, tag = 'input window, operand 1, single buffered']
    #allocation6 [shape = 's32[1]{0}', space=sflag, size = 0x4, scoped, tag = 'scoped memory for tpu_custom_call.1']
    #allocation7 [shape = 'u8[4096]{0}', space=vmem, size = 0x1000, scoped, tag = 'output window, operand 0, single buffered']
    %12 = vsyncpa [#allocation3], 0
    %13 = vsyncpa [#allocation6], 0
    %14 = vsyncpa [#allocation4], 0
    // Predicated region
    $region2: #{tpu_custom_call.1} parent=1 // pred_check
      _
    $region3: #{tpu_custom_call.1} parent=1 // pred_check_branch
      %16 = sbr.rel (0) target = $region5
    $region4: #{tpu_custom_call.1} parent=1 // pred_region
      %18 = vsyncadd [#allocation3], 0
      %s20 = sshll.u32 %s0, 4
      %s21 = int_to_ptr.hbm [resolvable:$true] %s20
      %s22 = sshll.u32 [#allocation2], 4
      %s23 = int_to_ptr.vmem [resolvable:$true] %s22
      %25 = dma.hbm_to_vmem [thread:$0]  %s21, 384, %s23, [#allocation3]
    $region5: #{tpu_custom_call.1} parent=1 // pred_fallthru
      _
    // Predicated region
    $region6: #{tpu_custom_call.1} parent=1 // pred_check
      _
    $region7: #{tpu_custom_call.1} parent=1 // pred_check_branch
      %27 = sbr.rel (0) target = $region9
    $region8: #{tpu_custom_call.1} parent=1 // pred_region
      %29 = vsyncadd [#allocation6], 0
      %s30 = sshll.u32 %s1, 4
      %s31 = int_to_ptr.hbm [resolvable:$true] %s30
      %s32 = sshll.u32 [#allocation5], 4
      %s33 = int_to_ptr.vmem [resolvable:$true] %s32
      %38 = dma.hbm_to_vmem [thread:$0]  %s31, 24576, %s33, [#allocation6], 256, 256, 16
    $region9: #{tpu_custom_call.1} parent=1 // pred_fallthru
      _
    // Predicated region
    $region10: #{tpu_custom_call.1} parent=1 // pred_check
      _
    $region11: #{tpu_custom_call.1} parent=1 // pred_check_branch
      %40 = sbr.rel (0) target = $region13
    $region12: #{tpu_custom_call.1} parent=1 // pred_region
      _
    $region13: #{tpu_custom_call.1} parent=1 // pred_fallthru
      _
    // Predicated region
    $region14: #{tpu_custom_call.1} parent=1 // pred_check
      _
    $region15: #{tpu_custom_call.1} parent=1 // pred_check_branch
      %42 = sbr.rel (0) target = $region17
    $region16: #{tpu_custom_call.1} parent=1 // pred_region
      _
    $region17: #{tpu_custom_call.1} parent=1 // pred_fallthru
      _
    // Predicated region
    $region18: #{tpu_custom_call.1} parent=1 // pred_check
      _
    $region19: #{tpu_custom_call.1} parent=1 // pred_check_branch
      %44 = sbr.rel (0) target = $region21
    $region20: #{tpu_custom_call.1} parent=1 // pred_region
      _
    $region21: #{tpu_custom_call.1} parent=1 // pred_fallthru
      _
    // Predicated region
    $region22: #{tpu_custom_call.1} parent=1 // pred_check
      _
    $region23: #{tpu_custom_call.1} parent=1 // pred_check_branch
      %46 = sbr.rel (0) target = $region25
    $region24: #{tpu_custom_call.1} parent=1 // pred_region
      _
    $region25: #{tpu_custom_call.1} parent=1 // pred_fallthru
      _
    // Predicated region
    $region26: #{tpu_custom_call.1} parent=1 // pred_check
      _
    $region27: #{tpu_custom_call.1} parent=1 // pred_check_branch
      %48 = sbr.rel (0) target = $region29
    $region28: #{tpu_custom_call.1} parent=1 // pred_region
      _
    $region29: #{tpu_custom_call.1} parent=1 // pred_fallthru
      _
    // Predicated region
    $region30: #{tpu_custom_call.1} parent=1 // pred_check
      _
    $region31: #{tpu_custom_call.1} parent=1 // pred_check_branch
      %50 = sbr.rel (0) target = $region33
    $region32: #{tpu_custom_call.1} parent=1 // pred_region
      %52 = dma.done [#allocation3], 384
    $region33: #{tpu_custom_call.1} parent=1 // pred_fallthru
      _
    // Predicated region
    $region34: #{tpu_custom_call.1} parent=1 // pred_check
      _
    $region35: #{tpu_custom_call.1} parent=1 // pred_check_branch
      %54 = sbr.rel (0) target = $region37
    $region36: #{tpu_custom_call.1} parent=1 // pred_region
      %56 = dma.done [#allocation6], 24576
    $region37: #{tpu_custom_call.1} parent=1 // pred_fallthru
      _
    %v57 = vld [vmem:[#allocation2] sm:$0xff]
    %v58 = vld [vmem:[#allocation2 + $0x8] sm:$0xff]
    %v59 = vld [vmem:[#allocation2 + $0x10] sm:$0xff]
    %v60 = vld [vmem:[#allocation5] sm:$0xff]
    %v61 = vld [vmem:[#allocation5 + $0x8] sm:$0xff]
    %v62 = vld [vmem:[#allocation5 + $0x10] sm:$0xff]
    %v63 = vld [vmem:[#allocation5 + $0x18] sm:$0xff]
    %v64 = vld [vmem:[#allocation5 + $0x20] sm:$0xff]
    %v65 = vld [vmem:[#allocation5 + $0x28] sm:$0xff]
    %v66 = vld [vmem:[#allocation5 + $0x30] sm:$0xff]
    %v67 = vld [vmem:[#allocation5 + $0x38] sm:$0xff]
    %v68 = vld [vmem:[#allocation5 + $0x40] sm:$0xff]
    %v69 = vld [vmem:[#allocation5 + $0x48] sm:$0xff]
    %v70 = vld [vmem:[#allocation5 + $0x50] sm:$0xff]
    %v71 = vld [vmem:[#allocation5 + $0x58] sm:$0xff]
    %v72 = vld [vmem:[#allocation5 + $0x60] sm:$0xff]
    %v73 = vld [vmem:[#allocation5 + $0x68] sm:$0xff]
    %v74 = vld [vmem:[#allocation5 + $0x70] sm:$0xff]
    %v75 = vld [vmem:[#allocation5 + $0x78] sm:$0xff]
    %v76 = vld [vmem:[#allocation5 + $0x80] sm:$0xff]
    %v77 = vld [vmem:[#allocation5 + $0x88] sm:$0xff]
    %v78 = vld [vmem:[#allocation5 + $0x90] sm:$0xff]
    %v79 = vld [vmem:[#allocation5 + $0x98] sm:$0xff]
    %v80 = vld [vmem:[#allocation5 + $0xa0] sm:$0xff]
    %v81 = vld [vmem:[#allocation5 + $0xa8] sm:$0xff]
    %v82 = vld [vmem:[#allocation5 + $0xb0] sm:$0xff]
    %v83 = vld [vmem:[#allocation5 + $0xb8] sm:$0xff]
    %v84 = vld [vmem:[#allocation5 + $0xc0] sm:$0xff]
    %v85 = vld [vmem:[#allocation5 + $0xc8] sm:$0xff]
    %v86 = vld [vmem:[#allocation5 + $0xd0] sm:$0xff]
    %v87 = vld [vmem:[#allocation5 + $0xd8] sm:$0xff]
    %v88 = vld [vmem:[#allocation5 + $0xe0] sm:$0xff]
    %v89 = vld [vmem:[#allocation5 + $0xe8] sm:$0xff]
    %v90 = vld [vmem:[#allocation5 + $0xf0] sm:$0xff]
    %v91 = vld [vmem:[#allocation5 + $0xf8] sm:$0xff]
    %v92 = vld [vmem:[#allocation5 + $0x100] sm:$0xff]
    %v93 = vld [vmem:[#allocation5 + $0x108] sm:$0xff]
    %v94 = vld [vmem:[#allocation5 + $0x110] sm:$0xff]
    %v95 = vld [vmem:[#allocation5 + $0x118] sm:$0xff]
    %v96 = vld [vmem:[#allocation5 + $0x120] sm:$0xff]
    %v97 = vld [vmem:[#allocation5 + $0x128] sm:$0xff]
    %v98 = vld [vmem:[#allocation5 + $0x130] sm:$0xff]
    %v99 = vld [vmem:[#allocation5 + $0x138] sm:$0xff]
    %v100 = vld [vmem:[#allocation5 + $0x140] sm:$0xff]
    %v101 = vld [vmem:[#allocation5 + $0x148] sm:$0xff]
    %v102 = vld [vmem:[#allocation5 + $0x150] sm:$0xff]
    %v103 = vld [vmem:[#allocation5 + $0x158] sm:$0xff]
    %v104 = vld [vmem:[#allocation5 + $0x160] sm:$0xff]
    %v105 = vld [vmem:[#allocation5 + $0x168] sm:$0xff]
    %v106 = vld [vmem:[#allocation5 + $0x170] sm:$0xff]
    %v107 = vld [vmem:[#allocation5 + $0x178] sm:$0xff]
    %v108 = vld [vmem:[#allocation5 + $0x180] sm:$0xff]
    %v109 = vld [vmem:[#allocation5 + $0x188] sm:$0xff]
    %v110 = vld [vmem:[#allocation5 + $0x190] sm:$0xff]
    %v111 = vld [vmem:[#allocation5 + $0x198] sm:$0xff]
    %v112 = vld [vmem:[#allocation5 + $0x1a0] sm:$0xff]
    %v113 = vld [vmem:[#allocation5 + $0x1a8] sm:$0xff]
    %v114 = vld [vmem:[#allocation5 + $0x1b0] sm:$0xff]
    %v115 = vld [vmem:[#allocation5 + $0x1b8] sm:$0xff]
    %v116 = vld [vmem:[#allocation5 + $0x1c0] sm:$0xff]
    %v117 = vld [vmem:[#allocation5 + $0x1c8] sm:$0xff]
    %v118 = vld [vmem:[#allocation5 + $0x1d0] sm:$0xff]
    %v119 = vld [vmem:[#allocation5 + $0x1d8] sm:$0xff]
    %v120 = vld [vmem:[#allocation5 + $0x1e0] sm:$0xff]
    %v121 = vld [vmem:[#allocation5 + $0x1e8] sm:$0xff]
    %v122 = vld [vmem:[#allocation5 + $0x1f0] sm:$0xff]
    %v123 = vld [vmem:[#allocation5 + $0x1f8] sm:$0xff]
    %v124 = vld [vmem:[#allocation5 + $0x200] sm:$0xff]
    %v125 = vld [vmem:[#allocation5 + $0x208] sm:$0xff]
    %v126 = vld [vmem:[#allocation5 + $0x210] sm:$0xff]
    %v127 = vld [vmem:[#allocation5 + $0x218] sm:$0xff]
    %v128 = vld [vmem:[#allocation5 + $0x220] sm:$0xff]
    %v129 = vld [vmem:[#allocation5 + $0x228] sm:$0xff]
    %v130 = vld [vmem:[#allocation5 + $0x230] sm:$0xff]
    %v131 = vld [vmem:[#allocation5 + $0x238] sm:$0xff]
    %v132 = vld [vmem:[#allocation5 + $0x240] sm:$0xff]
    %v133 = vld [vmem:[#allocation5 + $0x248] sm:$0xff]
    %v134 = vld [vmem:[#allocation5 + $0x250] sm:$0xff]
    %v135 = vld [vmem:[#allocation5 + $0x258] sm:$0xff]
    %v136 = vld [vmem:[#allocation5 + $0x260] sm:$0xff]
    %v137 = vld [vmem:[#allocation5 + $0x268] sm:$0xff]
    %v138 = vld [vmem:[#allocation5 + $0x270] sm:$0xff]
    %v139 = vld [vmem:[#allocation5 + $0x278] sm:$0xff]
    %v140 = vld [vmem:[#allocation5 + $0x280] sm:$0xff]
    %v141 = vld [vmem:[#allocation5 + $0x288] sm:$0xff]
    %v142 = vld [vmem:[#allocation5 + $0x290] sm:$0xff]
    %v143 = vld [vmem:[#allocation5 + $0x298] sm:$0xff]
    %v144 = vld [vmem:[#allocation5 + $0x2a0] sm:$0xff]
    %v145 = vld [vmem:[#allocation5 + $0x2a8] sm:$0xff]
    %v146 = vld [vmem:[#allocation5 + $0x2b0] sm:$0xff]
    %v147 = vld [vmem:[#allocation5 + $0x2b8] sm:$0xff]
    %v148 = vld [vmem:[#allocation5 + $0x2c0] sm:$0xff]
    %v149 = vld [vmem:[#allocation5 + $0x2c8] sm:$0xff]
    %v150 = vld [vmem:[#allocation5 + $0x2d0] sm:$0xff]
    %v151 = vld [vmem:[#allocation5 + $0x2d8] sm:$0xff]
    %v152 = vld [vmem:[#allocation5 + $0x2e0] sm:$0xff]
    %v153 = vld [vmem:[#allocation5 + $0x2e8] sm:$0xff]
    %v154 = vld [vmem:[#allocation5 + $0x2f0] sm:$0xff]
    %v155 = vld [vmem:[#allocation5 + $0x2f8] sm:$0xff]
    %v156 = vld [vmem:[#allocation5 + $0x300] sm:$0xff]
    %v157 = vld [vmem:[#allocation5 + $0x308] sm:$0xff]
    %v158 = vld [vmem:[#allocation5 + $0x310] sm:$0xff]
    %v159 = vld [vmem:[#allocation5 + $0x318] sm:$0xff]
    %v160 = vld [vmem:[#allocation5 + $0x320] sm:$0xff]
    %v161 = vld [vmem:[#allocation5 + $0x328] sm:$0xff]
    %v162 = vld [vmem:[#allocation5 + $0x330] sm:$0xff]
    %v163 = vld [vmem:[#allocation5 + $0x338] sm:$0xff]
    %v164 = vld [vmem:[#allocation5 + $0x340] sm:$0xff]
    %v165 = vld [vmem:[#allocation5 + $0x348] sm:$0xff]
    %v166 = vld [vmem:[#allocation5 + $0x350] sm:$0xff]
    %v167 = vld [vmem:[#allocation5 + $0x358] sm:$0xff]
    %v168 = vld [vmem:[#allocation5 + $0x360] sm:$0xff]
    %v169 = vld [vmem:[#allocation5 + $0x368] sm:$0xff]
    %v170 = vld [vmem:[#allocation5 + $0x370] sm:$0xff]
    %v171 = vld [vmem:[#allocation5 + $0x378] sm:$0xff]
    %v172 = vld [vmem:[#allocation5 + $0x380] sm:$0xff]
    %v173 = vld [vmem:[#allocation5 + $0x388] sm:$0xff]
    %v174 = vld [vmem:[#allocation5 + $0x390] sm:$0xff]
    %v175 = vld [vmem:[#allocation5 + $0x398] sm:$0xff]
    %v176 = vld [vmem:[#allocation5 + $0x3a0] sm:$0xff]
    %v177 = vld [vmem:[#allocation5 + $0x3a8] sm:$0xff]
    %v178 = vld [vmem:[#allocation5 + $0x3b0] sm:$0xff]
    %v179 = vld [vmem:[#allocation5 + $0x3b8] sm:$0xff]
    %v180 = vld [vmem:[#allocation5 + $0x3c0] sm:$0xff]
    %v181 = vld [vmem:[#allocation5 + $0x3c8] sm:$0xff]
    %v182 = vld [vmem:[#allocation5 + $0x3d0] sm:$0xff]
    %v183 = vld [vmem:[#allocation5 + $0x3d8] sm:$0xff]
    %v184 = vld [vmem:[#allocation5 + $0x3e0] sm:$0xff]
    %v185 = vld [vmem:[#allocation5 + $0x3e8] sm:$0xff]
    %v186 = vld [vmem:[#allocation5 + $0x3f0] sm:$0xff]
    %v187 = vld [vmem:[#allocation5 + $0x3f8] sm:$0xff]
    %v188 = vld [vmem:[#allocation5 + $0x400] sm:$0xff]
    %v189 = vld [vmem:[#allocation5 + $0x408] sm:$0xff]
    %v190 = vld [vmem:[#allocation5 + $0x410] sm:$0xff]
    %v191 = vld [vmem:[#allocation5 + $0x418] sm:$0xff]
    %v192 = vld [vmem:[#allocation5 + $0x420] sm:$0xff]
    %v193 = vld [vmem:[#allocation5 + $0x428] sm:$0xff]
    %v194 = vld [vmem:[#allocation5 + $0x430] sm:$0xff]
    %v195 = vld [vmem:[#allocation5 + $0x438] sm:$0xff]
    %v196 = vld [vmem:[#allocation5 + $0x440] sm:$0xff]
    %v197 = vld [vmem:[#allocation5 + $0x448] sm:$0xff]
    %v198 = vld [vmem:[#allocation5 + $0x450] sm:$0xff]
    %v199 = vld [vmem:[#allocation5 + $0x458] sm:$0xff]
    %v200 = vld [vmem:[#allocation5 + $0x460] sm:$0xff]
    %v201 = vld [vmem:[#allocation5 + $0x468] sm:$0xff]
    %v202 = vld [vmem:[#allocation5 + $0x470] sm:$0xff]
    %v203 = vld [vmem:[#allocation5 + $0x478] sm:$0xff]
    %v204 = vld [vmem:[#allocation5 + $0x480] sm:$0xff]
    %v205 = vld [vmem:[#allocation5 + $0x488] sm:$0xff]
    %v206 = vld [vmem:[#allocation5 + $0x490] sm:$0xff]
    %v207 = vld [vmem:[#allocation5 + $0x498] sm:$0xff]
    %v208 = vld [vmem:[#allocation5 + $0x4a0] sm:$0xff]
    %v209 = vld [vmem:[#allocation5 + $0x4a8] sm:$0xff]
    %v210 = vld [vmem:[#allocation5 + $0x4b0] sm:$0xff]
    %v211 = vld [vmem:[#allocation5 + $0x4b8] sm:$0xff]
    %v212 = vld [vmem:[#allocation5 + $0x4c0] sm:$0xff]
    %v213 = vld [vmem:[#allocation5 + $0x4c8] sm:$0xff]
    %v214 = vld [vmem:[#allocation5 + $0x4d0] sm:$0xff]
    %v215 = vld [vmem:[#allocation5 + $0x4d8] sm:$0xff]
    %v216 = vld [vmem:[#allocation5 + $0x4e0] sm:$0xff]
    %v217 = vld [vmem:[#allocation5 + $0x4e8] sm:$0xff]
    %v218 = vld [vmem:[#allocation5 + $0x4f0] sm:$0xff]
    %v219 = vld [vmem:[#allocation5 + $0x4f8] sm:$0xff]
    %v220 = vld [vmem:[#allocation5 + $0x500] sm:$0xff]
    %v221 = vld [vmem:[#allocation5 + $0x508] sm:$0xff]
    %v222 = vld [vmem:[#allocation5 + $0x510] sm:$0xff]
    %v223 = vld [vmem:[#allocation5 + $0x518] sm:$0xff]
    %v224 = vld [vmem:[#allocation5 + $0x520] sm:$0xff]
    %v225 = vld [vmem:[#allocation5 + $0x528] sm:$0xff]
    %v226 = vld [vmem:[#allocation5 + $0x530] sm:$0xff]
    %v227 = vld [vmem:[#allocation5 + $0x538] sm:$0xff]
    %v228 = vld [vmem:[#allocation5 + $0x540] sm:$0xff]
    %v229 = vld [vmem:[#allocation5 + $0x548] sm:$0xff]
    %v230 = vld [vmem:[#allocation5 + $0x550] sm:$0xff]
    %v231 = vld [vmem:[#allocation5 + $0x558] sm:$0xff]
    %v232 = vld [vmem:[#allocation5 + $0x560] sm:$0xff]
    %v233 = vld [vmem:[#allocation5 + $0x568] sm:$0xff]
    %v234 = vld [vmem:[#allocation5 + $0x570] sm:$0xff]
    %v235 = vld [vmem:[#allocation5 + $0x578] sm:$0xff]
    %v236 = vld [vmem:[#allocation5 + $0x580] sm:$0xff]
    %v237 = vld [vmem:[#allocation5 + $0x588] sm:$0xff]
    %v238 = vld [vmem:[#allocation5 + $0x590] sm:$0xff]
    %v239 = vld [vmem:[#allocation5 + $0x598] sm:$0xff]
    %v240 = vld [vmem:[#allocation5 + $0x5a0] sm:$0xff]
    %v241 = vld [vmem:[#allocation5 + $0x5a8] sm:$0xff]
    %v242 = vld [vmem:[#allocation5 + $0x5b0] sm:$0xff]
    %v243 = vld [vmem:[#allocation5 + $0x5b8] sm:$0xff]
    %v244 = vld [vmem:[#allocation5 + $0x5c0] sm:$0xff]
    %v245 = vld [vmem:[#allocation5 + $0x5c8] sm:$0xff]
    %v246 = vld [vmem:[#allocation5 + $0x5d0] sm:$0xff]
    %v247 = vld [vmem:[#allocation5 + $0x5d8] sm:$0xff]
    %v248 = vld [vmem:[#allocation5 + $0x5e0] sm:$0xff]
    %v249 = vld [vmem:[#allocation5 + $0x5e8] sm:$0xff]
    %v250 = vld [vmem:[#allocation5 + $0x5f0] sm:$0xff]
    %v251 = vld [vmem:[#allocation5 + $0x5f8] sm:$0xff]
    %v252 = vld [vmem:[%s2] sm:$0xf]
    %v254 = vperm.slane %v252, 0
    %v255 = vperm.slane %v252, 1
    %v256 = vperm.slane %v252, 2
    %v257 = vperm.slane %v252, 3
    %v265 = vunpack.c.l.b16 %v57
    %v266 = vunpack.c.h.b16 %v57
    %v267 = vunpack.c.l.b16 %v58
    %v268 = vunpack.c.h.b16 %v58
    %v269 = vunpack.c.l.b16 %v59
    %v270 = vunpack.c.h.b16 %v59
    %v271 = vpack.c.b16 %v265, %v265
    %v272 = vpack.c.b16 %v266, %v266
    %v273 = vpack.c.b16 %v267, %v267
    %v274 = vpack.c.b16 %v268, %v268
    %v275 = vpack.c.b16 %v269, %v269
    %v276 = vpack.c.b16 %v270, %v270
    %v475 = vunpack.c.l.b16 %v60
    %v476 = vunpack.c.h.b16 %v60
    %v477 = vunpack.c.l.b16 %v61
    %v478 = vunpack.c.h.b16 %v61
    %v479 = vunpack.c.l.b16 %v62
    %v480 = vunpack.c.h.b16 %v62
    %v481 = vunpack.c.l.b16 %v63
    %v482 = vunpack.c.h.b16 %v63
    %v483 = vunpack.c.l.b16 %v64
    %v484 = vunpack.c.h.b16 %v64
    %v485 = vunpack.c.l.b16 %v65
    %v486 = vunpack.c.h.b16 %v65
    %v487 = vunpack.c.l.b16 %v66
    %v488 = vunpack.c.h.b16 %v66
    %v489 = vunpack.c.l.b16 %v67
    %v490 = vunpack.c.h.b16 %v67
    %v491 = vunpack.c.l.b16 %v68
    %v492 = vunpack.c.h.b16 %v68
    %v493 = vunpack.c.l.b16 %v69
    %v494 = vunpack.c.h.b16 %v69
    %v495 = vunpack.c.l.b16 %v70
    %v496 = vunpack.c.h.b16 %v70
    %v497 = vunpack.c.l.b16 %v71
    %v498 = vunpack.c.h.b16 %v71
    %v499 = vunpack.c.l.b16 %v72
    %v500 = vunpack.c.h.b16 %v72
    %v501 = vunpack.c.l.b16 %v73
    %v502 = vunpack.c.h.b16 %v73
    %v503 = vunpack.c.l.b16 %v74
    %v504 = vunpack.c.h.b16 %v74
    %v505 = vunpack.c.l.b16 %v75
    %v506 = vunpack.c.h.b16 %v75
    %v507 = vunpack.c.l.b16 %v76
    %v508 = vunpack.c.h.b16 %v76
    %v509 = vunpack.c.l.b16 %v77
    %v510 = vunpack.c.h.b16 %v77
    %v511 = vunpack.c.l.b16 %v78
    %v512 = vunpack.c.h.b16 %v78
    %v513 = vunpack.c.l.b16 %v79
    %v514 = vunpack.c.h.b16 %v79
    %v515 = vunpack.c.l.b16 %v80
    %v516 = vunpack.c.h.b16 %v80
    %v517 = vunpack.c.l.b16 %v81
    %v518 = vunpack.c.h.b16 %v81
    %v519 = vunpack.c.l.b16 %v82
    %v520 = vunpack.c.h.b16 %v82
    %v521 = vunpack.c.l.b16 %v83
    %v522 = vunpack.c.h.b16 %v83
    %v523 = vunpack.c.l.b16 %v84
    %v524 = vunpack.c.h.b16 %v84
    %v525 = vunpack.c.l.b16 %v85
    %v526 = vunpack.c.h.b16 %v85
    %v527 = vunpack.c.l.b16 %v86
    %v528 = vunpack.c.h.b16 %v86
    %v529 = vunpack.c.l.b16 %v87
    %v530 = vunpack.c.h.b16 %v87
    %v531 = vunpack.c.l.b16 %v88
    %v532 = vunpack.c.h.b16 %v88
    %v533 = vunpack.c.l.b16 %v89
    %v534 = vunpack.c.h.b16 %v89
    %v535 = vunpack.c.l.b16 %v90
    %v536 = vunpack.c.h.b16 %v90
    %v537 = vunpack.c.l.b16 %v91
    %v538 = vunpack.c.h.b16 %v91
    %v539 = vunpack.c.l.b16 %v92
    %v540 = vunpack.c.h.b16 %v92
    %v541 = vunpack.c.l.b16 %v93
    %v542 = vunpack.c.h.b16 %v93
    %v543 = vunpack.c.l.b16 %v94
    %v544 = vunpack.c.h.b16 %v94
    %v545 = vunpack.c.l.b16 %v95
    %v546 = vunpack.c.h.b16 %v95
    %v547 = vunpack.c.l.b16 %v96
    %v548 = vunpack.c.h.b16 %v96
    %v549 = vunpack.c.l.b16 %v97
    %v550 = vunpack.c.h.b16 %v97
    %v551 = vunpack.c.l.b16 %v98
    %v552 = vunpack.c.h.b16 %v98
    %v553 = vunpack.c.l.b16 %v99
    %v554 = vunpack.c.h.b16 %v99
    %v555 = vunpack.c.l.b16 %v100
    %v556 = vunpack.c.h.b16 %v100
    %v557 = vunpack.c.l.b16 %v101
    %v558 = vunpack.c.h.b16 %v101
    %v559 = vunpack.c.l.b16 %v102
    %v560 = vunpack.c.h.b16 %v102
    %v561 = vunpack.c.l.b16 %v103
    %v562 = vunpack.c.h.b16 %v103
    %v563 = vunpack.c.l.b16 %v104
    %v564 = vunpack.c.h.b16 %v104
    %v565 = vunpack.c.l.b16 %v105
    %v566 = vunpack.c.h.b16 %v105
    %v567 = vunpack.c.l.b16 %v106
    %v568 = vunpack.c.h.b16 %v106
    %v569 = vunpack.c.l.b16 %v107
    %v570 = vunpack.c.h.b16 %v107
    %v571 = vunpack.c.l.b16 %v108
    %v572 = vunpack.c.h.b16 %v108
    %v573 = vunpack.c.l.b16 %v109
    %v574 = vunpack.c.h.b16 %v109
    %v575 = vunpack.c.l.b16 %v110
    %v576 = vunpack.c.h.b16 %v110
    %v577 = vunpack.c.l.b16 %v111
    %v578 = vunpack.c.h.b16 %v111
    %v579 = vunpack.c.l.b16 %v112
    %v580 = vunpack.c.h.b16 %v112
    %v581 = vunpack.c.l.b16 %v113
    %v582 = vunpack.c.h.b16 %v113
    %v583 = vunpack.c.l.b16 %v114
    %v584 = vunpack.c.h.b16 %v114
    %v585 = vunpack.c.l.b16 %v115
    %v586 = vunpack.c.h.b16 %v115
    %v587 = vunpack.c.l.b16 %v116
    %v588 = vunpack.c.h.b16 %v116
    %v589 = vunpack.c.l.b16 %v117
    %v590 = vunpack.c.h.b16 %v117
    %v591 = vunpack.c.l.b16 %v118
    %v592 = vunpack.c.h.b16 %v118
    %v593 = vunpack.c.l.b16 %v119
    %v594 = vunpack.c.h.b16 %v119
    %v595 = vunpack.c.l.b16 %v120
    %v596 = vunpack.c.h.b16 %v120
    %v597 = vunpack.c.l.b16 %v121
    %v598 = vunpack.c.h.b16 %v121
    %v599 = vunpack.c.l.b16 %v122
    %v600 = vunpack.c.h.b16 %v122
    %v601 = vunpack.c.l.b16 %v123
    %v602 = vunpack.c.h.b16 %v123
    %v603 = vunpack.c.l.b16 %v124
    %v604 = vunpack.c.h.b16 %v124
    %v605 = vunpack.c.l.b16 %v125
    %v606 = vunpack.c.h.b16 %v125
    %v607 = vunpack.c.l.b16 %v126
    %v608 = vunpack.c.h.b16 %v126
    %v609 = vunpack.c.l.b16 %v127
    %v610 = vunpack.c.h.b16 %v127
    %v611 = vunpack.c.l.b16 %v128
    %v612 = vunpack.c.h.b16 %v128
    %v613 = vunpack.c.l.b16 %v129
    %v614 = vunpack.c.h.b16 %v129
    %v615 = vunpack.c.l.b16 %v130
    %v616 = vunpack.c.h.b16 %v130
    %v617 = vunpack.c.l.b16 %v131
    %v618 = vunpack.c.h.b16 %v131
    %v619 = vunpack.c.l.b16 %v132
    %v620 = vunpack.c.h.b16 %v132
    %v621 = vunpack.c.l.b16 %v133
    %v622 = vunpack.c.h.b16 %v133
    %v623 = vunpack.c.l.b16 %v134
    %v624 = vunpack.c.h.b16 %v134
    %v625 = vunpack.c.l.b16 %v135
    %v626 = vunpack.c.h.b16 %v135
    %v627 = vunpack.c.l.b16 %v136
    %v628 = vunpack.c.h.b16 %v136
    %v629 = vunpack.c.l.b16 %v137
    %v630 = vunpack.c.h.b16 %v137
    %v631 = vunpack.c.l.b16 %v138
    %v632 = vunpack.c.h.b16 %v138
    %v633 = vunpack.c.l.b16 %v139
    %v634 = vunpack.c.h.b16 %v139
    %v635 = vunpack.c.l.b16 %v140
    %v636 = vunpack.c.h.b16 %v140
    %v637 = vunpack.c.l.b16 %v141
    %v638 = vunpack.c.h.b16 %v141
    %v639 = vunpack.c.l.b16 %v142
    %v640 = vunpack.c.h.b16 %v142
    %v641 = vunpack.c.l.b16 %v143
    %v642 = vunpack.c.h.b16 %v143
    %v643 = vunpack.c.l.b16 %v144
    %v644 = vunpack.c.h.b16 %v144
    %v645 = vunpack.c.l.b16 %v145
    %v646 = vunpack.c.h.b16 %v145
    %v647 = vunpack.c.l.b16 %v146
    %v648 = vunpack.c.h.b16 %v146
    %v649 = vunpack.c.l.b16 %v147
    %v650 = vunpack.c.h.b16 %v147
    %v651 = vunpack.c.l.b16 %v148
    %v652 = vunpack.c.h.b16 %v148
    %v653 = vunpack.c.l.b16 %v149
    %v654 = vunpack.c.h.b16 %v149
    %v655 = vunpack.c.l.b16 %v150
    %v656 = vunpack.c.h.b16 %v150
    %v657 = vunpack.c.l.b16 %v151
    %v658 = vunpack.c.h.b16 %v151
    %v659 = vunpack.c.l.b16 %v152
    %v660 = vunpack.c.h.b16 %v152
    %v661 = vunpack.c.l.b16 %v153
    %v662 = vunpack.c.h.b16 %v153
    %v663 = vunpack.c.l.b16 %v154
    %v664 = vunpack.c.h.b16 %v154
    %v665 = vunpack.c.l.b16 %v155
    %v666 = vunpack.c.h.b16 %v155
    %v667 = vunpack.c.l.b16 %v156
    %v668 = vunpack.c.h.b16 %v156
    %v669 = vunpack.c.l.b16 %v157
    %v670 = vunpack.c.h.b16 %v157
    %v671 = vunpack.c.l.b16 %v158
    %v672 = vunpack.c.h.b16 %v158
    %v673 = vunpack.c.l.b16 %v159
    %v674 = vunpack.c.h.b16 %v159
    %v675 = vunpack.c.l.b16 %v160
    %v676 = vunpack.c.h.b16 %v160
    %v677 = vunpack.c.l.b16 %v161
    %v678 = vunpack.c.h.b16 %v161
    %v679 = vunpack.c.l.b16 %v162
    %v680 = vunpack.c.h.b16 %v162
    %v681 = vunpack.c.l.b16 %v163
    %v682 = vunpack.c.h.b16 %v163
    %v683 = vunpack.c.l.b16 %v164
    %v684 = vunpack.c.h.b16 %v164
    %v685 = vunpack.c.l.b16 %v165
    %v686 = vunpack.c.h.b16 %v165
    %v687 = vunpack.c.l.b16 %v166
    %v688 = vunpack.c.h.b16 %v166
    %v689 = vunpack.c.l.b16 %v167
    %v690 = vunpack.c.h.b16 %v167
    %v691 = vunpack.c.l.b16 %v168
    %v692 = vunpack.c.h.b16 %v168
    %v693 = vunpack.c.l.b16 %v169
    %v694 = vunpack.c.h.b16 %v169
    %v695 = vunpack.c.l.b16 %v170
    %v696 = vunpack.c.h.b16 %v170
    %v697 = vunpack.c.l.b16 %v171
    %v698 = vunpack.c.h.b16 %v171
    %v699 = vunpack.c.l.b16 %v172
    %v700 = vunpack.c.h.b16 %v172
    %v701 = vunpack.c.l.b16 %v173
    %v702 = vunpack.c.h.b16 %v173
    %v703 = vunpack.c.l.b16 %v174
    %v704 = vunpack.c.h.b16 %v174
    %v705 = vunpack.c.l.b16 %v175
    %v706 = vunpack.c.h.b16 %v175
    %v707 = vunpack.c.l.b16 %v176
    %v708 = vunpack.c.h.b16 %v176
    %v709 = vunpack.c.l.b16 %v177
    %v710 = vunpack.c.h.b16 %v177
    %v711 = vunpack.c.l.b16 %v178
    %v712 = vunpack.c.h.b16 %v178
    %v713 = vunpack.c.l.b16 %v179
    %v714 = vunpack.c.h.b16 %v179
    %v715 = vunpack.c.l.b16 %v180
    %v716 = vunpack.c.h.b16 %v180
    %v717 = vunpack.c.l.b16 %v181
    %v718 = vunpack.c.h.b16 %v181
    %v719 = vunpack.c.l.b16 %v182
    %v720 = vunpack.c.h.b16 %v182
    %v721 = vunpack.c.l.b16 %v183
    %v722 = vunpack.c.h.b16 %v183
    %v723 = vunpack.c.l.b16 %v184
    %v724 = vunpack.c.h.b16 %v184
    %v725 = vunpack.c.l.b16 %v185
    %v726 = vunpack.c.h.b16 %v185
    %v727 = vunpack.c.l.b16 %v186
    %v728 = vunpack.c.h.b16 %v186
    %v729 = vunpack.c.l.b16 %v187
    %v730 = vunpack.c.h.b16 %v187
    %v731 = vunpack.c.l.b16 %v188
    %v732 = vunpack.c.h.b16 %v188
    %v733 = vunpack.c.l.b16 %v189
    %v734 = vunpack.c.h.b16 %v189
    %v735 = vunpack.c.l.b16 %v190
    %v736 = vunpack.c.h.b16 %v190
    %v737 = vunpack.c.l.b16 %v191
    %v738 = vunpack.c.h.b16 %v191
    %v739 = vunpack.c.l.b16 %v192
    %v740 = vunpack.c.h.b16 %v192
    %v741 = vunpack.c.l.b16 %v193
    %v742 = vunpack.c.h.b16 %v193
    %v743 = vunpack.c.l.b16 %v194
    %v744 = vunpack.c.h.b16 %v194
    %v745 = vunpack.c.l.b16 %v195
    %v746 = vunpack.c.h.b16 %v195
    %v747 = vunpack.c.l.b16 %v196
    %v748 = vunpack.c.h.b16 %v196
    %v749 = vunpack.c.l.b16 %v197
    %v750 = vunpack.c.h.b16 %v197
    %v751 = vunpack.c.l.b16 %v198
    %v752 = vunpack.c.h.b16 %v198
    %v753 = vunpack.c.l.b16 %v199
    %v754 = vunpack.c.h.b16 %v199
    %v755 = vunpack.c.l.b16 %v200
    %v756 = vunpack.c.h.b16 %v200
    %v757 = vunpack.c.l.b16 %v201
    %v758 = vunpack.c.h.b16 %v201
    %v759 = vunpack.c.l.b16 %v202
    %v760 = vunpack.c.h.b16 %v202
    %v761 = vunpack.c.l.b16 %v203
    %v762 = vunpack.c.h.b16 %v203
    %v763 = vunpack.c.l.b16 %v204
    %v764 = vunpack.c.h.b16 %v204
    %v765 = vunpack.c.l.b16 %v205
    %v766 = vunpack.c.h.b16 %v205
    %v767 = vunpack.c.l.b16 %v206
    %v768 = vunpack.c.h.b16 %v206
    %v769 = vunpack.c.l.b16 %v207
    %v770 = vunpack.c.h.b16 %v207
    %v771 = vunpack.c.l.b16 %v208
    %v772 = vunpack.c.h.b16 %v208
    %v773 = vunpack.c.l.b16 %v209
    %v774 = vunpack.c.h.b16 %v209
    %v775 = vunpack.c.l.b16 %v210
    %v776 = vunpack.c.h.b16 %v210
    %v777 = vunpack.c.l.b16 %v211
    %v778 = vunpack.c.h.b16 %v211
    %v779 = vunpack.c.l.b16 %v212
    %v780 = vunpack.c.h.b16 %v212
    %v781 = vunpack.c.l.b16 %v213
    %v782 = vunpack.c.h.b16 %v213
    %v783 = vunpack.c.l.b16 %v214
    %v784 = vunpack.c.h.b16 %v214
    %v785 = vunpack.c.l.b16 %v215
    %v786 = vunpack.c.h.b16 %v215
    %v787 = vunpack.c.l.b16 %v216
    %v788 = vunpack.c.h.b16 %v216
    %v789 = vunpack.c.l.b16 %v217
    %v790 = vunpack.c.h.b16 %v217
    %v791 = vunpack.c.l.b16 %v218
    %v792 = vunpack.c.h.b16 %v218
    %v793 = vunpack.c.l.b16 %v219
    %v794 = vunpack.c.h.b16 %v219
    %v795 = vunpack.c.l.b16 %v220
    %v796 = vunpack.c.h.b16 %v220
    %v797 = vunpack.c.l.b16 %v221
    %v798 = vunpack.c.h.b16 %v221
    %v799 = vunpack.c.l.b16 %v222
    %v800 = vunpack.c.h.b16 %v222
    %v801 = vunpack.c.l.b16 %v223
    %v802 = vunpack.c.h.b16 %v223
    %v803 = vunpack.c.l.b16 %v224
    %v804 = vunpack.c.h.b16 %v224
    %v805 = vunpack.c.l.b16 %v225
    %v806 = vunpack.c.h.b16 %v225
    %v807 = vunpack.c.l.b16 %v226
    %v808 = vunpack.c.h.b16 %v226
    %v809 = vunpack.c.l.b16 %v227
    %v810 = vunpack.c.h.b16 %v227
    %v811 = vunpack.c.l.b16 %v228
    %v812 = vunpack.c.h.b16 %v228
    %v813 = vunpack.c.l.b16 %v229
    %v814 = vunpack.c.h.b16 %v229
    %v815 = vunpack.c.l.b16 %v230
    %v816 = vunpack.c.h.b16 %v230
    %v817 = vunpack.c.l.b16 %v231
    %v818 = vunpack.c.h.b16 %v231
    %v819 = vunpack.c.l.b16 %v232
    %v820 = vunpack.c.h.b16 %v232
    %v821 = vunpack.c.l.b16 %v233
    %v822 = vunpack.c.h.b16 %v233
    %v823 = vunpack.c.l.b16 %v234
    %v824 = vunpack.c.h.b16 %v234
    %v825 = vunpack.c.l.b16 %v235
    %v826 = vunpack.c.h.b16 %v235
    %v827 = vunpack.c.l.b16 %v236
    %v828 = vunpack.c.h.b16 %v236
    %v829 = vunpack.c.l.b16 %v237
    %v830 = vunpack.c.h.b16 %v237
    %v831 = vunpack.c.l.b16 %v238
    %v832 = vunpack.c.h.b16 %v238
    %v833 = vunpack.c.l.b16 %v239
    %v834 = vunpack.c.h.b16 %v239
    %v835 = vunpack.c.l.b16 %v240
    %v836 = vunpack.c.h.b16 %v240
    %v837 = vunpack.c.l.b16 %v241
    %v838 = vunpack.c.h.b16 %v241
    %v839 = vunpack.c.l.b16 %v242
    %v840 = vunpack.c.h.b16 %v242
    %v841 = vunpack.c.l.b16 %v243
    %v842 = vunpack.c.h.b16 %v243
    %v843 = vunpack.c.l.b16 %v244
    %v844 = vunpack.c.h.b16 %v244
    %v845 = vunpack.c.l.b16 %v245
    %v846 = vunpack.c.h.b16 %v245
    %v847 = vunpack.c.l.b16 %v246
    %v848 = vunpack.c.h.b16 %v246
    %v849 = vunpack.c.l.b16 %v247
    %v850 = vunpack.c.h.b16 %v247
    %v851 = vunpack.c.l.b16 %v248
    %v852 = vunpack.c.h.b16 %v248
    %v853 = vunpack.c.l.b16 %v249
    %v854 = vunpack.c.h.b16 %v249
    %v855 = vunpack.c.l.b16 %v250
    %v856 = vunpack.c.h.b16 %v250
    %v857 = vunpack.c.l.b16 %v251
    %v858 = vunpack.c.h.b16 %v251
    %v859 = vpack.c.b16 %v479, %v475
    %v860 = vpack.c.b16 %v480, %v476
    %v861 = vpack.c.b16 %v481, %v477
    %v862 = vpack.c.b16 %v482, %v478
    %v863 = vpack.c.b16 %v487, %v483
    %v864 = vpack.c.b16 %v488, %v484
    %v865 = vpack.c.b16 %v489, %v485
    %v866 = vpack.c.b16 %v490, %v486
    %v867 = vpack.c.b16 %v495, %v491
    %v868 = vpack.c.b16 %v496, %v492
    %v869 = vpack.c.b16 %v497, %v493
    %v870 = vpack.c.b16 %v498, %v494
    %v871 = vpack.c.b16 %v503, %v499
    %v872 = vpack.c.b16 %v504, %v500
    %v873 = vpack.c.b16 %v505, %v501
    %v874 = vpack.c.b16 %v506, %v502
    %v875 = vpack.c.b16 %v511, %v507
    %v876 = vpack.c.b16 %v512, %v508
    %v877 = vpack.c.b16 %v513, %v509
    %v878 = vpack.c.b16 %v514, %v510
    %v879 = vpack.c.b16 %v519, %v515
    %v880 = vpack.c.b16 %v520, %v516
    %v881 = vpack.c.b16 %v521, %v517
    %v882 = vpack.c.b16 %v522, %v518
    %v883 = vpack.c.b16 %v527, %v523
    %v884 = vpack.c.b16 %v528, %v524
    %v885 = vpack.c.b16 %v529, %v525
    %v886 = vpack.c.b16 %v530, %v526
    %v887 = vpack.c.b16 %v535, %v531
    %v888 = vpack.c.b16 %v536, %v532
    %v889 = vpack.c.b16 %v537, %v533
    %v890 = vpack.c.b16 %v538, %v534
    %v891 = vpack.c.b16 %v543, %v539
    %v892 = vpack.c.b16 %v544, %v540
    %v893 = vpack.c.b16 %v545, %v541
    %v894 = vpack.c.b16 %v546, %v542
    %v895 = vpack.c.b16 %v551, %v547
    %v896 = vpack.c.b16 %v552, %v548
    %v897 = vpack.c.b16 %v553, %v549
    %v898 = vpack.c.b16 %v554, %v550
    %v899 = vpack.c.b16 %v559, %v555
    %v900 = vpack.c.b16 %v560, %v556
    %v901 = vpack.c.b16 %v561, %v557
    %v902 = vpack.c.b16 %v562, %v558
    %v903 = vpack.c.b16 %v567, %v563
    %v904 = vpack.c.b16 %v568, %v564
    %v905 = vpack.c.b16 %v569, %v565
    %v906 = vpack.c.b16 %v570, %v566
    %v907 = vpack.c.b16 %v575, %v571
    %v908 = vpack.c.b16 %v576, %v572
    %v909 = vpack.c.b16 %v577, %v573
    %v910 = vpack.c.b16 %v578, %v574
    %v911 = vpack.c.b16 %v583, %v579
    %v912 = vpack.c.b16 %v584, %v580
    %v913 = vpack.c.b16 %v585, %v581
    %v914 = vpack.c.b16 %v586, %v582
    %v915 = vpack.c.b16 %v591, %v587
    %v916 = vpack.c.b16 %v592, %v588
    %v917 = vpack.c.b16 %v593, %v589
    %v918 = vpack.c.b16 %v594, %v590
    %v919 = vpack.c.b16 %v599, %v595
    %v920 = vpack.c.b16 %v600, %v596
    %v921 = vpack.c.b16 %v601, %v597
    %v922 = vpack.c.b16 %v602, %v598
    %v923 = vpack.c.b16 %v607, %v603
    %v924 = vpack.c.b16 %v608, %v604
    %v925 = vpack.c.b16 %v609, %v605
    %v926 = vpack.c.b16 %v610, %v606
    %v927 = vpack.c.b16 %v615, %v611
    %v928 = vpack.c.b16 %v616, %v612
    %v929 = vpack.c.b16 %v617, %v613
    %v930 = vpack.c.b16 %v618, %v614
    %v931 = vpack.c.b16 %v623, %v619
    %v932 = vpack.c.b16 %v624, %v620
    %v933 = vpack.c.b16 %v625, %v621
    %v934 = vpack.c.b16 %v626, %v622
    %v935 = vpack.c.b16 %v631, %v627
    %v936 = vpack.c.b16 %v632, %v628
    %v937 = vpack.c.b16 %v633, %v629
    %v938 = vpack.c.b16 %v634, %v630
    %v939 = vpack.c.b16 %v639, %v635
    %v940 = vpack.c.b16 %v640, %v636
    %v941 = vpack.c.b16 %v641, %v637
    %v942 = vpack.c.b16 %v642, %v638
    %v943 = vpack.c.b16 %v647, %v643
    %v944 = vpack.c.b16 %v648, %v644
    %v945 = vpack.c.b16 %v649, %v645
    %v946 = vpack.c.b16 %v650, %v646
    %v947 = vpack.c.b16 %v655, %v651
    %v948 = vpack.c.b16 %v656, %v652
    %v949 = vpack.c.b16 %v657, %v653
    %v950 = vpack.c.b16 %v658, %v654
    %v951 = vpack.c.b16 %v663, %v659
    %v952 = vpack.c.b16 %v664, %v660
    %v953 = vpack.c.b16 %v665, %v661
    %v954 = vpack.c.b16 %v666, %v662
    %v955 = vpack.c.b16 %v671, %v667
    %v956 = vpack.c.b16 %v672, %v668
    %v957 = vpack.c.b16 %v673, %v669
    %v958 = vpack.c.b16 %v674, %v670
    %v959 = vpack.c.b16 %v679, %v675
    %v960 = vpack.c.b16 %v680, %v676
    %v961 = vpack.c.b16 %v681, %v677
    %v962 = vpack.c.b16 %v682, %v678
    %v963 = vpack.c.b16 %v687, %v683
    %v964 = vpack.c.b16 %v688, %v684
    %v965 = vpack.c.b16 %v689, %v685
    %v966 = vpack.c.b16 %v690, %v686
    %v967 = vpack.c.b16 %v695, %v691
    %v968 = vpack.c.b16 %v696, %v692
    %v969 = vpack.c.b16 %v697, %v693
    %v970 = vpack.c.b16 %v698, %v694
    %v971 = vpack.c.b16 %v703, %v699
    %v972 = vpack.c.b16 %v704, %v700
    %v973 = vpack.c.b16 %v705, %v701
    %v974 = vpack.c.b16 %v706, %v702
    %v975 = vpack.c.b16 %v711, %v707
    %v976 = vpack.c.b16 %v712, %v708
    %v977 = vpack.c.b16 %v713, %v709
    %v978 = vpack.c.b16 %v714, %v710
    %v979 = vpack.c.b16 %v719, %v715
    %v980 = vpack.c.b16 %v720, %v716
    %v981 = vpack.c.b16 %v721, %v717
    %v982 = vpack.c.b16 %v722, %v718
    %v983 = vpack.c.b16 %v727, %v723
    %v984 = vpack.c.b16 %v728, %v724
    %v985 = vpack.c.b16 %v729, %v725
    %v986 = vpack.c.b16 %v730, %v726
    %v987 = vpack.c.b16 %v735, %v731
    %v988 = vpack.c.b16 %v736, %v732
    %v989 = vpack.c.b16 %v737, %v733
    %v990 = vpack.c.b16 %v738, %v734
    %v991 = vpack.c.b16 %v743, %v739
    %v992 = vpack.c.b16 %v744, %v740
    %v993 = vpack.c.b16 %v745, %v741
    %v994 = vpack.c.b16 %v746, %v742
    %v995 = vpack.c.b16 %v751, %v747
    %v996 = vpack.c.b16 %v752, %v748
    %v997 = vpack.c.b16 %v753, %v749
    %v998 = vpack.c.b16 %v754, %v750
    %v999 = vpack.c.b16 %v759, %v755
    %v1000 = vpack.c.b16 %v760, %v756
    %v1001 = vpack.c.b16 %v761, %v757
    %v1002 = vpack.c.b16 %v762, %v758
    %v1003 = vpack.c.b16 %v767, %v763
    %v1004 = vpack.c.b16 %v768, %v764
    %v1005 = vpack.c.b16 %v769, %v765
    %v1006 = vpack.c.b16 %v770, %v766
    %v1007 = vpack.c.b16 %v775, %v771
    %v1008 = vpack.c.b16 %v776, %v772
    %v1009 = vpack.c.b16 %v777, %v773
    %v1010 = vpack.c.b16 %v778, %v774
    %v1011 = vpack.c.b16 %v783, %v779
    %v1012 = vpack.c.b16 %v784, %v780
    %v1013 = vpack.c.b16 %v785, %v781
    %v1014 = vpack.c.b16 %v786, %v782
    %v1015 = vpack.c.b16 %v791, %v787
    %v1016 = vpack.c.b16 %v792, %v788
    %v1017 = vpack.c.b16 %v793, %v789
    %v1018 = vpack.c.b16 %v794, %v790
    %v1019 = vpack.c.b16 %v799, %v795
    %v1020 = vpack.c.b16 %v800, %v796
    %v1021 = vpack.c.b16 %v801, %v797
    %v1022 = vpack.c.b16 %v802, %v798
    %v1023 = vpack.c.b16 %v807, %v803
    %v1024 = vpack.c.b16 %v808, %v804
    %v1025 = vpack.c.b16 %v809, %v805
    %v1026 = vpack.c.b16 %v810, %v806
    %v1027 = vpack.c.b16 %v815, %v811
    %v1028 = vpack.c.b16 %v816, %v812
    %v1029 = vpack.c.b16 %v817, %v813
    %v1030 = vpack.c.b16 %v818, %v814
    %v1031 = vpack.c.b16 %v823, %v819
    %v1032 = vpack.c.b16 %v824, %v820
    %v1033 = vpack.c.b16 %v825, %v821
    %v1034 = vpack.c.b16 %v826, %v822
    %v1035 = vpack.c.b16 %v831, %v827
    %v1036 = vpack.c.b16 %v832, %v828
    %v1037 = vpack.c.b16 %v833, %v829
    %v1038 = vpack.c.b16 %v834, %v830
    %v1039 = vpack.c.b16 %v839, %v835
    %v1040 = vpack.c.b16 %v840, %v836
    %v1041 = vpack.c.b16 %v841, %v837
    %v1042 = vpack.c.b16 %v842, %v838
    %v1043 = vpack.c.b16 %v847, %v843
    %v1044 = vpack.c.b16 %v848, %v844
    %v1045 = vpack.c.b16 %v849, %v845
    %v1046 = vpack.c.b16 %v850, %v846
    %v1047 = vpack.c.b16 %v855, %v851
    %v1048 = vpack.c.b16 %v856, %v852
    %v1049 = vpack.c.b16 %v857, %v853
    %v1050 = vpack.c.b16 %v858, %v854
    %1243 = vmatpush.bf16.msra.mxu0 %v887
    %1244 = vmatpush.bf16.msra.mxu0 %v883
    %1245 = vmatpush.bf16.msra.mxu0 %v879
    %1246 = vmatpush.bf16.msra.mxu0 %v875
    %1247 = vmatpush.bf16.msra.mxu0 %v871
    %1248 = vmatpush.bf16.msra.mxu0 %v867
    %1249 = vmatpush.bf16.msra.mxu0 %v863
    %1250 = vmatpush.bf16.msra.mxu0 %v859
    %1251 = vmatmul.bf16.gmra.mxu0 %v271
    %v1252 = vpop.f32.mrf.mxu0
    %v1253 = vadd.f32 %v254, %v1252
    %v1254 = vpop.f32.mrf.mxu0
    %1255 = vdwg.mxu0
    %1256 = vmatpush.bf16.msra.mxu0 %v919
    %1257 = vmatpush.bf16.msra.mxu0 %v915
    %1258 = vmatpush.bf16.msra.mxu0 %v911
    %1259 = vmatpush.bf16.msra.mxu0 %v907
    %1260 = vmatpush.bf16.msra.mxu0 %v903
    %1261 = vmatpush.bf16.msra.mxu0 %v899
    %1262 = vmatpush.bf16.msra.mxu0 %v895
    %1263 = vmatpush.bf16.msra.mxu0 %v891
    %1264 = vmatmul.bf16.gmra.mxu0 %v272
    %v1265 = vpop.f32.mrf.mxu0
    %v1266 = vadd.f32 %v1253, %v1265
    %v1267 = vpop.f32.mrf.mxu0
    %1268 = vdwg.mxu0
    %1269 = vmatpush.bf16.msra.mxu0 %v951
    %1270 = vmatpush.bf16.msra.mxu0 %v947
    %1271 = vmatpush.bf16.msra.mxu0 %v943
    %1272 = vmatpush.bf16.msra.mxu0 %v939
    %1273 = vmatpush.bf16.msra.mxu0 %v935
    %1274 = vmatpush.bf16.msra.mxu0 %v931
    %1275 = vmatpush.bf16.msra.mxu0 %v927
    %1276 = vmatpush.bf16.msra.mxu0 %v923
    %1277 = vmatmul.bf16.gmra.mxu0 %v273
    %v1278 = vpop.f32.mrf.mxu0
    %v1279 = vadd.f32 %v1266, %v1278
    %v1280 = vpop.f32.mrf.mxu0
    %1281 = vdwg.mxu0
    %1282 = vmatpush.bf16.msra.mxu0 %v983
    %1283 = vmatpush.bf16.msra.mxu0 %v979
    %1284 = vmatpush.bf16.msra.mxu0 %v975
    %1285 = vmatpush.bf16.msra.mxu0 %v971
    %1286 = vmatpush.bf16.msra.mxu0 %v967
    %1287 = vmatpush.bf16.msra.mxu0 %v963
    %1288 = vmatpush.bf16.msra.mxu0 %v959
    %1289 = vmatpush.bf16.msra.mxu0 %v955
    %1290 = vmatmul.bf16.gmra.mxu0 %v274
    %v1291 = vpop.f32.mrf.mxu0
    %v1292 = vadd.f32 %v1279, %v1291
    %v1293 = vpop.f32.mrf.mxu0
    %1294 = vdwg.mxu0
    %1295 = vmatpush.bf16.msra.mxu0 %v1015
    %1296 = vmatpush.bf16.msra.mxu0 %v1011
    %1297 = vmatpush.bf16.msra.mxu0 %v1007
    %1298 = vmatpush.bf16.msra.mxu0 %v1003
    %1299 = vmatpush.bf16.msra.mxu0 %v999
    %1300 = vmatpush.bf16.msra.mxu0 %v995
    %1301 = vmatpush.bf16.msra.mxu0 %v991
    %1302 = vmatpush.bf16.msra.mxu0 %v987
    %1303 = vmatmul.bf16.gmra.mxu0 %v275
    %v1304 = vpop.f32.mrf.mxu0
    %v1305 = vadd.f32 %v1292, %v1304
    %v1306 = vpop.f32.mrf.mxu0
    %1307 = vdwg.mxu0
    %1308 = vmatpush.bf16.msra.mxu0 %v1047
    %1309 = vmatpush.bf16.msra.mxu0 %v1043
    %1310 = vmatpush.bf16.msra.mxu0 %v1039
    %1311 = vmatpush.bf16.msra.mxu0 %v1035
    %1312 = vmatpush.bf16.msra.mxu0 %v1031
    %1313 = vmatpush.bf16.msra.mxu0 %v1027
    %1314 = vmatpush.bf16.msra.mxu0 %v1023
    %1315 = vmatpush.bf16.msra.mxu0 %v1019
    %1316 = vmatmul.bf16.gmra.mxu0 %v276
    %v1317 = vpop.f32.mrf.mxu0
    %v1318 = vadd.f32 %v1305, %v1317
    %v1319 = vpop.f32.mrf.mxu0
    %1320 = vdwg.mxu0
    %1321 = vmatpush.bf16.msra.mxu0 %v888
    %1322 = vmatpush.bf16.msra.mxu0 %v884
    %1323 = vmatpush.bf16.msra.mxu0 %v880
    %1324 = vmatpush.bf16.msra.mxu0 %v876
    %1325 = vmatpush.bf16.msra.mxu0 %v872
    %1326 = vmatpush.bf16.msra.mxu0 %v868
    %1327 = vmatpush.bf16.msra.mxu0 %v864
    %1328 = vmatpush.bf16.msra.mxu0 %v860
    %1329 = vmatmul.bf16.gmra.mxu0 %v271
    %v1330 = vpop.f32.mrf.mxu0
    %v1331 = vadd.f32 %v255, %v1330
    %v1332 = vpop.f32.mrf.mxu0
    %1333 = vdwg.mxu0
    %1334 = vmatpush.bf16.msra.mxu0 %v920
    %1335 = vmatpush.bf16.msra.mxu0 %v916
    %1336 = vmatpush.bf16.msra.mxu0 %v912
    %1337 = vmatpush.bf16.msra.mxu0 %v908
    %1338 = vmatpush.bf16.msra.mxu0 %v904
    %1339 = vmatpush.bf16.msra.mxu0 %v900
    %1340 = vmatpush.bf16.msra.mxu0 %v896
    %1341 = vmatpush.bf16.msra.mxu0 %v892
    %1342 = vmatmul.bf16.gmra.mxu0 %v272
    %v1343 = vpop.f32.mrf.mxu0
    %v1344 = vadd.f32 %v1331, %v1343
    %v1345 = vpop.f32.mrf.mxu0
    %1346 = vdwg.mxu0
    %1347 = vmatpush.bf16.msra.mxu0 %v952
    %1348 = vmatpush.bf16.msra.mxu0 %v948
    %1349 = vmatpush.bf16.msra.mxu0 %v944
    %1350 = vmatpush.bf16.msra.mxu0 %v940
    %1351 = vmatpush.bf16.msra.mxu0 %v936
    %1352 = vmatpush.bf16.msra.mxu0 %v932
    %1353 = vmatpush.bf16.msra.mxu0 %v928
    %1354 = vmatpush.bf16.msra.mxu0 %v924
    %1355 = vmatmul.bf16.gmra.mxu0 %v273
    %v1356 = vpop.f32.mrf.mxu0
    %v1357 = vadd.f32 %v1344, %v1356
    %v1358 = vpop.f32.mrf.mxu0
    %1359 = vdwg.mxu0
    %1360 = vmatpush.bf16.msra.mxu0 %v984
    %1361 = vmatpush.bf16.msra.mxu0 %v980
    %1362 = vmatpush.bf16.msra.mxu0 %v976
    %1363 = vmatpush.bf16.msra.mxu0 %v972
    %1364 = vmatpush.bf16.msra.mxu0 %v968
    %1365 = vmatpush.bf16.msra.mxu0 %v964
    %1366 = vmatpush.bf16.msra.mxu0 %v960
    %1367 = vmatpush.bf16.msra.mxu0 %v956
    %1368 = vmatmul.bf16.gmra.mxu0 %v274
    %v1369 = vpop.f32.mrf.mxu0
    %v1370 = vadd.f32 %v1357, %v1369
    %v1371 = vpop.f32.mrf.mxu0
    %1372 = vdwg.mxu0
    %1373 = vmatpush.bf16.msra.mxu0 %v1016
    %1374 = vmatpush.bf16.msra.mxu0 %v1012
    %1375 = vmatpush.bf16.msra.mxu0 %v1008
    %1376 = vmatpush.bf16.msra.mxu0 %v1004
    %1377 = vmatpush.bf16.msra.mxu0 %v1000
    %1378 = vmatpush.bf16.msra.mxu0 %v996
    %1379 = vmatpush.bf16.msra.mxu0 %v992
    %1380 = vmatpush.bf16.msra.mxu0 %v988
    %1381 = vmatmul.bf16.gmra.mxu0 %v275
    %v1382 = vpop.f32.mrf.mxu0
    %v1383 = vadd.f32 %v1370, %v1382
    %v1384 = vpop.f32.mrf.mxu0
    %1385 = vdwg.mxu0
    %1386 = vmatpush.bf16.msra.mxu0 %v1048
    %1387 = vmatpush.bf16.msra.mxu0 %v1044
    %1388 = vmatpush.bf16.msra.mxu0 %v1040
    %1389 = vmatpush.bf16.msra.mxu0 %v1036
    %1390 = vmatpush.bf16.msra.mxu0 %v1032
    %1391 = vmatpush.bf16.msra.mxu0 %v1028
    %1392 = vmatpush.bf16.msra.mxu0 %v1024
    %1393 = vmatpush.bf16.msra.mxu0 %v1020
    %1394 = vmatmul.bf16.gmra.mxu0 %v276
    %v1395 = vpop.f32.mrf.mxu0
    %v1396 = vadd.f32 %v1383, %v1395
    %v1397 = vpop.f32.mrf.mxu0
    %1398 = vdwg.mxu0
    %1399 = vmatpush.bf16.msra.mxu0 %v889
    %1400 = vmatpush.bf16.msra.mxu0 %v885
    %1401 = vmatpush.bf16.msra.mxu0 %v881
    %1402 = vmatpush.bf16.msra.mxu0 %v877
    %1403 = vmatpush.bf16.msra.mxu0 %v873
    %1404 = vmatpush.bf16.msra.mxu0 %v869
    %1405 = vmatpush.bf16.msra.mxu0 %v865
    %1406 = vmatpush.bf16.msra.mxu0 %v861
    %1407 = vmatmul.bf16.gmra.mxu0 %v271
    %v1408 = vpop.f32.mrf.mxu0
    %v1409 = vadd.f32 %v256, %v1408
    %v1410 = vpop.f32.mrf.mxu0
    %1411 = vdwg.mxu0
    %1412 = vmatpush.bf16.msra.mxu0 %v921
    %1413 = vmatpush.bf16.msra.mxu0 %v917
    %1414 = vmatpush.bf16.msra.mxu0 %v913
    %1415 = vmatpush.bf16.msra.mxu0 %v909
    %1416 = vmatpush.bf16.msra.mxu0 %v905
    %1417 = vmatpush.bf16.msra.mxu0 %v901
    %1418 = vmatpush.bf16.msra.mxu0 %v897
    %1419 = vmatpush.bf16.msra.mxu0 %v893
    %1420 = vmatmul.bf16.gmra.mxu0 %v272
    %v1421 = vpop.f32.mrf.mxu0
    %v1422 = vadd.f32 %v1409, %v1421
    %v1423 = vpop.f32.mrf.mxu0
    %1424 = vdwg.mxu0
    %1425 = vmatpush.bf16.msra.mxu0 %v953
    %1426 = vmatpush.bf16.msra.mxu0 %v949
    %1427 = vmatpush.bf16.msra.mxu0 %v945
    %1428 = vmatpush.bf16.msra.mxu0 %v941
    %1429 = vmatpush.bf16.msra.mxu0 %v937
    %1430 = vmatpush.bf16.msra.mxu0 %v933
    %1431 = vmatpush.bf16.msra.mxu0 %v929
    %1432 = vmatpush.bf16.msra.mxu0 %v925
    %1433 = vmatmul.bf16.gmra.mxu0 %v273
    %v1434 = vpop.f32.mrf.mxu0
    %v1435 = vadd.f32 %v1422, %v1434
    %v1436 = vpop.f32.mrf.mxu0
    %1437 = vdwg.mxu0
    %1438 = vmatpush.bf16.msra.mxu0 %v985
    %1439 = vmatpush.bf16.msra.mxu0 %v981
    %1440 = vmatpush.bf16.msra.mxu0 %v977
    %1441 = vmatpush.bf16.msra.mxu0 %v973
    %1442 = vmatpush.bf16.msra.mxu0 %v969
    %1443 = vmatpush.bf16.msra.mxu0 %v965
    %1444 = vmatpush.bf16.msra.mxu0 %v961
    %1445 = vmatpush.bf16.msra.mxu0 %v957
    %1446 = vmatmul.bf16.gmra.mxu0 %v274
    %v1447 = vpop.f32.mrf.mxu0
    %v1448 = vadd.f32 %v1435, %v1447
    %v1449 = vpop.f32.mrf.mxu0
    %1450 = vdwg.mxu0
    %1451 = vmatpush.bf16.msra.mxu0 %v1017
    %1452 = vmatpush.bf16.msra.mxu0 %v1013
    %1453 = vmatpush.bf16.msra.mxu0 %v1009
    %1454 = vmatpush.bf16.msra.mxu0 %v1005
    %1455 = vmatpush.bf16.msra.mxu0 %v1001
    %1456 = vmatpush.bf16.msra.mxu0 %v997
    %1457 = vmatpush.bf16.msra.mxu0 %v993
    %1458 = vmatpush.bf16.msra.mxu0 %v989
    %1459 = vmatmul.bf16.gmra.mxu0 %v275
    %v1460 = vpop.f32.mrf.mxu0
    %v1461 = vadd.f32 %v1448, %v1460
    %v1462 = vpop.f32.mrf.mxu0
    %1463 = vdwg.mxu0
    %1464 = vmatpush.bf16.msra.mxu0 %v1049
    %1465 = vmatpush.bf16.msra.mxu0 %v1045
    %1466 = vmatpush.bf16.msra.mxu0 %v1041
    %1467 = vmatpush.bf16.msra.mxu0 %v1037
    %1468 = vmatpush.bf16.msra.mxu0 %v1033
    %1469 = vmatpush.bf16.msra.mxu0 %v1029
    %1470 = vmatpush.bf16.msra.mxu0 %v1025
    %1471 = vmatpush.bf16.msra.mxu0 %v1021
    %1472 = vmatmul.bf16.gmra.mxu0 %v276
    %v1473 = vpop.f32.mrf.mxu0
    %v1474 = vadd.f32 %v1461, %v1473
    %v1475 = vpop.f32.mrf.mxu0
    %1476 = vdwg.mxu0
    %1477 = vmatpush.bf16.msra.mxu0 %v890
    %1478 = vmatpush.bf16.msra.mxu0 %v886
    %1479 = vmatpush.bf16.msra.mxu0 %v882
    %1480 = vmatpush.bf16.msra.mxu0 %v878
    %1481 = vmatpush.bf16.msra.mxu0 %v874
    %1482 = vmatpush.bf16.msra.mxu0 %v870
    %1483 = vmatpush.bf16.msra.mxu0 %v866
    %1484 = vmatpush.bf16.msra.mxu0 %v862
    %1485 = vmatmul.bf16.gmra.mxu0 %v271
    %v1486 = vpop.f32.mrf.mxu0
    %v1487 = vadd.f32 %v257, %v1486
    %v1488 = vpop.f32.mrf.mxu0
    %1489 = vdwg.mxu0
    %1490 = vmatpush.bf16.msra.mxu0 %v922
    %1491 = vmatpush.bf16.msra.mxu0 %v918
    %1492 = vmatpush.bf16.msra.mxu0 %v914
    %1493 = vmatpush.bf16.msra.mxu0 %v910
    %1494 = vmatpush.bf16.msra.mxu0 %v906
    %1495 = vmatpush.bf16.msra.mxu0 %v902
    %1496 = vmatpush.bf16.msra.mxu0 %v898
    %1497 = vmatpush.bf16.msra.mxu0 %v894
    %1498 = vmatmul.bf16.gmra.mxu0 %v272
    %v1499 = vpop.f32.mrf.mxu0
    %v1500 = vadd.f32 %v1487, %v1499
    %v1501 = vpop.f32.mrf.mxu0
    %1502 = vdwg.mxu0
    %1503 = vmatpush.bf16.msra.mxu0 %v954
    %1504 = vmatpush.bf16.msra.mxu0 %v950
    %1505 = vmatpush.bf16.msra.mxu0 %v946
    %1506 = vmatpush.bf16.msra.mxu0 %v942
    %1507 = vmatpush.bf16.msra.mxu0 %v938
    %1508 = vmatpush.bf16.msra.mxu0 %v934
    %1509 = vmatpush.bf16.msra.mxu0 %v930
    %1510 = vmatpush.bf16.msra.mxu0 %v926
    %1511 = vmatmul.bf16.gmra.mxu0 %v273
    %v1512 = vpop.f32.mrf.mxu0
    %v1513 = vadd.f32 %v1500, %v1512
    %v1514 = vpop.f32.mrf.mxu0
    %1515 = vdwg.mxu0
    %1516 = vmatpush.bf16.msra.mxu0 %v986
    %1517 = vmatpush.bf16.msra.mxu0 %v982
    %1518 = vmatpush.bf16.msra.mxu0 %v978
    %1519 = vmatpush.bf16.msra.mxu0 %v974
    %1520 = vmatpush.bf16.msra.mxu0 %v970
    %1521 = vmatpush.bf16.msra.mxu0 %v966
    %1522 = vmatpush.bf16.msra.mxu0 %v962
    %1523 = vmatpush.bf16.msra.mxu0 %v958
    %1524 = vmatmul.bf16.gmra.mxu0 %v274
    %v1525 = vpop.f32.mrf.mxu0
    %v1526 = vadd.f32 %v1513, %v1525
    %v1527 = vpop.f32.mrf.mxu0
    %1528 = vdwg.mxu0
    %1529 = vmatpush.bf16.msra.mxu0 %v1018
    %1530 = vmatpush.bf16.msra.mxu0 %v1014
    %1531 = vmatpush.bf16.msra.mxu0 %v1010
    %1532 = vmatpush.bf16.msra.mxu0 %v1006
    %1533 = vmatpush.bf16.msra.mxu0 %v1002
    %1534 = vmatpush.bf16.msra.mxu0 %v998
    %1535 = vmatpush.bf16.msra.mxu0 %v994
    %1536 = vmatpush.bf16.msra.mxu0 %v990
    %1537 = vmatmul.bf16.gmra.mxu0 %v275
    %v1538 = vpop.f32.mrf.mxu0
    %v1539 = vadd.f32 %v1526, %v1538
    %v1540 = vpop.f32.mrf.mxu0
    %1541 = vdwg.mxu0
    %1542 = vmatpush.bf16.msra.mxu0 %v1050
    %1543 = vmatpush.bf16.msra.mxu0 %v1046
    %1544 = vmatpush.bf16.msra.mxu0 %v1042
    %1545 = vmatpush.bf16.msra.mxu0 %v1038
    %1546 = vmatpush.bf16.msra.mxu0 %v1034
    %1547 = vmatpush.bf16.msra.mxu0 %v1030
    %1548 = vmatpush.bf16.msra.mxu0 %v1026
    %1549 = vmatpush.bf16.msra.mxu0 %v1022
    %1550 = vmatmul.bf16.gmra.mxu0 %v276
    %v1551 = vpop.f32.mrf.mxu0
    %v1552 = vadd.f32 %v1539, %v1551
    %v1553 = vpop.f32.mrf.mxu0
    %1554 = vdwg.mxu0
    %v1555 = vmax.f32 %v1318, 0.0
    %v1556 = vmax.f32 %v1396, 0.0
    %v1557 = vmax.f32 %v1474, 0.0
    %v1558 = vmax.f32 %v1552, 0.0
    %v1559 = vpack.c.bf16 %v1556, %v1555
    %v1560 = vpack.c.bf16 %v1558, %v1557
    %v1561 = vld [vmem:[%s3] sm:$0xf]
    %v1562 = vld [vmem:[%s3 + $0x4] sm:$0xf]
    %v1563 = vld [vmem:[%s3 + $0x8] sm:$0xf]
    %v1564 = vld [vmem:[%s3 + $0xc] sm:$0xf]
    %v1565 = vld [vmem:[%s3 + $0x10] sm:$0xf]
    %v1566 = vld [vmem:[%s3 + $0x14] sm:$0xf]
    %v1567 = vld [vmem:[%s3 + $0x18] sm:$0xf]
    %v1568 = vld [vmem:[%s3 + $0x1c] sm:$0xf]
    %v1569 = vld [vmem:[%s3 + $0x20] sm:$0xf]
    %v1570 = vld [vmem:[%s3 + $0x24] sm:$0xf]
    %v1571 = vld [vmem:[%s3 + $0x28] sm:$0xf]
    %v1572 = vld [vmem:[%s3 + $0x2c] sm:$0xf]
    %v1573 = vld [vmem:[%s3 + $0x30] sm:$0xf]
    %v1574 = vld [vmem:[%s3 + $0x34] sm:$0xf]
    %v1575 = vld [vmem:[%s3 + $0x38] sm:$0xf]
    %v1576 = vld [vmem:[%s3 + $0x3c] sm:$0xf]
    %v1593 = vunpack.c.l.b16 %v1561
    %v1594 = vunpack.c.l.b16 %v1562
    %v1595 = vunpack.c.l.b16 %v1563
    %v1596 = vunpack.c.l.b16 %v1564
    %v1597 = vunpack.c.l.b16 %v1565
    %v1598 = vunpack.c.l.b16 %v1566
    %v1599 = vunpack.c.l.b16 %v1567
    %v1600 = vunpack.c.l.b16 %v1568
    %v1601 = vunpack.c.l.b16 %v1569
    %v1602 = vunpack.c.l.b16 %v1570
    %v1603 = vunpack.c.l.b16 %v1571
    %v1604 = vunpack.c.l.b16 %v1572
    %v1605 = vunpack.c.l.b16 %v1573
    %v1606 = vunpack.c.l.b16 %v1574
    %v1607 = vunpack.c.l.b16 %v1575
    %v1608 = vunpack.c.l.b16 %v1576
    %v1609 = vpack.c.b16 %v1594, %v1593
    %v1610 = vpack.c.b16 %v1596, %v1595
    %v1611 = vpack.c.b16 %v1598, %v1597
    %v1612 = vpack.c.b16 %v1600, %v1599
    %v1613 = vpack.c.b16 %v1602, %v1601
    %v1614 = vpack.c.b16 %v1604, %v1603
    %v1615 = vpack.c.b16 %v1606, %v1605
    %v1616 = vpack.c.b16 %v1608, %v1607
    %1625 = vmatpush.bf16.msra.mxu0 %v1616
    %1626 = vmatpush.bf16.msra.mxu0 %v1615
    %1627 = vmatpush.bf16.msra.mxu0 %v1614
    %1628 = vmatpush.bf16.msra.mxu0 %v1613
    %1629 = vmatpush.bf16.msra.mxu0 %v1612
    %1630 = vmatpush.bf16.msra.mxu0 %v1611
    %1631 = vmatpush.bf16.msra.mxu0 %v1610
    %1632 = vmatpush.bf16.msra.mxu0 %v1609
    %1633 = vmatmul.bf16.gmra.mxu0 %v1559
    %v1634 = vpop.f32.mrf.mxu0
    %v1635 = vadd.f32 0.0, %v1634
    %v1636 = vpop.f32.mrf.mxu0
    %1637 = vdwg.mxu0
    %s1638 = scalar_lea.vmem %s3, 64
    %v1639 = vld [vmem:[%s1638] sm:$0xf]
    %v1640 = vld [vmem:[%s1638 + $0x4] sm:$0xf]
    %v1641 = vld [vmem:[%s1638 + $0x8] sm:$0xf]
    %v1642 = vld [vmem:[%s1638 + $0xc] sm:$0xf]
    %v1643 = vld [vmem:[%s1638 + $0x10] sm:$0xf]
    %v1644 = vld [vmem:[%s1638 + $0x14] sm:$0xf]
    %v1645 = vld [vmem:[%s1638 + $0x18] sm:$0xf]
    %v1646 = vld [vmem:[%s1638 + $0x1c] sm:$0xf]
    %v1647 = vld [vmem:[%s1638 + $0x20] sm:$0xf]
    %v1648 = vld [vmem:[%s1638 + $0x24] sm:$0xf]
    %v1649 = vld [vmem:[%s1638 + $0x28] sm:$0xf]
    %v1650 = vld [vmem:[%s1638 + $0x2c] sm:$0xf]
    %v1651 = vld [vmem:[%s1638 + $0x30] sm:$0xf]
    %v1652 = vld [vmem:[%s1638 + $0x34] sm:$0xf]
    %v1653 = vld [vmem:[%s1638 + $0x38] sm:$0xf]
    %v1654 = vld [vmem:[%s1638 + $0x3c] sm:$0xf]
    %v1656 = vunpack.c.h.b16 %v1559
    %v1657 = vpack.c.b16 %v1656, %v1656
    %v1675 = vunpack.c.l.b16 %v1639
    %v1676 = vunpack.c.l.b16 %v1640
    %v1677 = vunpack.c.l.b16 %v1641
    %v1678 = vunpack.c.l.b16 %v1642
    %v1679 = vunpack.c.l.b16 %v1643
    %v1680 = vunpack.c.l.b16 %v1644
    %v1681 = vunpack.c.l.b16 %v1645
    %v1682 = vunpack.c.l.b16 %v1646
    %v1683 = vunpack.c.l.b16 %v1647
    %v1684 = vunpack.c.l.b16 %v1648
    %v1685 = vunpack.c.l.b16 %v1649
    %v1686 = vunpack.c.l.b16 %v1650
    %v1687 = vunpack.c.l.b16 %v1651
    %v1688 = vunpack.c.l.b16 %v1652
    %v1689 = vunpack.c.l.b16 %v1653
    %v1690 = vunpack.c.l.b16 %v1654
    %v1691 = vpack.c.b16 %v1676, %v1675
    %v1692 = vpack.c.b16 %v1678, %v1677
    %v1693 = vpack.c.b16 %v1680, %v1679
    %v1694 = vpack.c.b16 %v1682, %v1681
    %v1695 = vpack.c.b16 %v1684, %v1683
    %v1696 = vpack.c.b16 %v1686, %v1685
    %v1697 = vpack.c.b16 %v1688, %v1687
    %v1698 = vpack.c.b16 %v1690, %v1689
    %1707 = vmatpush.bf16.msra.mxu0 %v1698
    %1708 = vmatpush.bf16.msra.mxu0 %v1697
    %1709 = vmatpush.bf16.msra.mxu0 %v1696
    %1710 = vmatpush.bf16.msra.mxu0 %v1695
    %1711 = vmatpush.bf16.msra.mxu0 %v1694
    %1712 = vmatpush.bf16.msra.mxu0 %v1693
    %1713 = vmatpush.bf16.msra.mxu0 %v1692
    %1714 = vmatpush.bf16.msra.mxu0 %v1691
    %1715 = vmatmul.bf16.gmra.mxu0 %v1657
    %v1716 = vpop.f32.mrf.mxu0
    %v1717 = vadd.f32 0.0, %v1716
    %v1718 = vpop.f32.mrf.mxu0
    %1719 = vdwg.mxu0
    %s1720 = scalar_lea.vmem %s3, 128
    %v1721 = vld [vmem:[%s1720] sm:$0xf]
    %v1722 = vld [vmem:[%s1720 + $0x4] sm:$0xf]
    %v1723 = vld [vmem:[%s1720 + $0x8] sm:$0xf]
    %v1724 = vld [vmem:[%s1720 + $0xc] sm:$0xf]
    %v1725 = vld [vmem:[%s1720 + $0x10] sm:$0xf]
    %v1726 = vld [vmem:[%s1720 + $0x14] sm:$0xf]
    %v1727 = vld [vmem:[%s1720 + $0x18] sm:$0xf]
    %v1728 = vld [vmem:[%s1720 + $0x1c] sm:$0xf]
    %v1729 = vld [vmem:[%s1720 + $0x20] sm:$0xf]
    %v1730 = vld [vmem:[%s1720 + $0x24] sm:$0xf]
    %v1731 = vld [vmem:[%s1720 + $0x28] sm:$0xf]
    %v1732 = vld [vmem:[%s1720 + $0x2c] sm:$0xf]
    %v1733 = vld [vmem:[%s1720 + $0x30] sm:$0xf]
    %v1734 = vld [vmem:[%s1720 + $0x34] sm:$0xf]
    %v1735 = vld [vmem:[%s1720 + $0x38] sm:$0xf]
    %v1736 = vld [vmem:[%s1720 + $0x3c] sm:$0xf]
    %v1753 = vunpack.c.l.b16 %v1721
    %v1754 = vunpack.c.l.b16 %v1722
    %v1755 = vunpack.c.l.b16 %v1723
    %v1756 = vunpack.c.l.b16 %v1724
    %v1757 = vunpack.c.l.b16 %v1725
    %v1758 = vunpack.c.l.b16 %v1726
    %v1759 = vunpack.c.l.b16 %v1727
    %v1760 = vunpack.c.l.b16 %v1728
    %v1761 = vunpack.c.l.b16 %v1729
    %v1762 = vunpack.c.l.b16 %v1730
    %v1763 = vunpack.c.l.b16 %v1731
    %v1764 = vunpack.c.l.b16 %v1732
    %v1765 = vunpack.c.l.b16 %v1733
    %v1766 = vunpack.c.l.b16 %v1734
    %v1767 = vunpack.c.l.b16 %v1735
    %v1768 = vunpack.c.l.b16 %v1736
    %v1769 = vpack.c.b16 %v1754, %v1753
    %v1770 = vpack.c.b16 %v1756, %v1755
    %v1771 = vpack.c.b16 %v1758, %v1757
    %v1772 = vpack.c.b16 %v1760, %v1759
    %v1773 = vpack.c.b16 %v1762, %v1761
    %v1774 = vpack.c.b16 %v1764, %v1763
    %v1775 = vpack.c.b16 %v1766, %v1765
    %v1776 = vpack.c.b16 %v1768, %v1767
    %1785 = vmatpush.bf16.msra.mxu0 %v1776
    %1786 = vmatpush.bf16.msra.mxu0 %v1775
    %1787 = vmatpush.bf16.msra.mxu0 %v1774
    %1788 = vmatpush.bf16.msra.mxu0 %v1773
    %1789 = vmatpush.bf16.msra.mxu0 %v1772
    %1790 = vmatpush.bf16.msra.mxu0 %v1771
    %1791 = vmatpush.bf16.msra.mxu0 %v1770
    %1792 = vmatpush.bf16.msra.mxu0 %v1769
    %1793 = vmatmul.bf16.gmra.mxu0 %v1560
    %v1794 = vpop.f32.mrf.mxu0
    %v1795 = vadd.f32 0.0, %v1794
    %v1796 = vpop.f32.mrf.mxu0
    %1797 = vdwg.mxu0
    %s1798 = scalar_lea.vmem %s3, 192
    %v1799 = vld [vmem:[%s1798] sm:$0xf]
    %v1800 = vld [vmem:[%s1798 + $0x4] sm:$0xf]
    %v1801 = vld [vmem:[%s1798 + $0x8] sm:$0xf]
    %v1802 = vld [vmem:[%s1798 + $0xc] sm:$0xf]
    %v1803 = vld [vmem:[%s1798 + $0x10] sm:$0xf]
    %v1804 = vld [vmem:[%s1798 + $0x14] sm:$0xf]
    %v1805 = vld [vmem:[%s1798 + $0x18] sm:$0xf]
    %v1806 = vld [vmem:[%s1798 + $0x1c] sm:$0xf]
    %v1807 = vld [vmem:[%s1798 + $0x20] sm:$0xf]
    %v1808 = vld [vmem:[%s1798 + $0x24] sm:$0xf]
    %v1809 = vld [vmem:[%s1798 + $0x28] sm:$0xf]
    %v1810 = vld [vmem:[%s1798 + $0x2c] sm:$0xf]
    %v1811 = vld [vmem:[%s1798 + $0x30] sm:$0xf]
    %v1812 = vld [vmem:[%s1798 + $0x34] sm:$0xf]
    %v1813 = vld [vmem:[%s1798 + $0x38] sm:$0xf]
    %v1814 = vld [vmem:[%s1798 + $0x3c] sm:$0xf]
    %v1816 = vunpack.c.h.b16 %v1560
    %v1817 = vpack.c.b16 %v1816, %v1816
    %v1835 = vunpack.c.l.b16 %v1799
    %v1836 = vunpack.c.l.b16 %v1800
    %v1837 = vunpack.c.l.b16 %v1801
    %v1838 = vunpack.c.l.b16 %v1802
    %v1839 = vunpack.c.l.b16 %v1803
    %v1840 = vunpack.c.l.b16 %v1804
    %v1841 = vunpack.c.l.b16 %v1805
    %v1842 = vunpack.c.l.b16 %v1806
    %v1843 = vunpack.c.l.b16 %v1807
    %v1844 = vunpack.c.l.b16 %v1808
    %v1845 = vunpack.c.l.b16 %v1809
    %v1846 = vunpack.c.l.b16 %v1810
    %v1847 = vunpack.c.l.b16 %v1811
    %v1848 = vunpack.c.l.b16 %v1812
    %v1849 = vunpack.c.l.b16 %v1813
    %v1850 = vunpack.c.l.b16 %v1814
    %v1851 = vpack.c.b16 %v1836, %v1835
    %v1852 = vpack.c.b16 %v1838, %v1837
    %v1853 = vpack.c.b16 %v1840, %v1839
    %v1854 = vpack.c.b16 %v1842, %v1841
    %v1855 = vpack.c.b16 %v1844, %v1843
    %v1856 = vpack.c.b16 %v1846, %v1845
    %v1857 = vpack.c.b16 %v1848, %v1847
    %v1858 = vpack.c.b16 %v1850, %v1849
    %1867 = vmatpush.bf16.msra.mxu0 %v1858
    %1868 = vmatpush.bf16.msra.mxu0 %v1857
    %1869 = vmatpush.bf16.msra.mxu0 %v1856
    %1870 = vmatpush.bf16.msra.mxu0 %v1855
    %1871 = vmatpush.bf16.msra.mxu0 %v1854
    %1872 = vmatpush.bf16.msra.mxu0 %v1853
    %1873 = vmatpush.bf16.msra.mxu0 %v1852
    %1874 = vmatpush.bf16.msra.mxu0 %v1851
    %1875 = vmatmul.bf16.gmra.mxu0 %v1817
    %v1876 = vpop.f32.mrf.mxu0
    %v1877 = vadd.f32 0.0, %v1876
    %v1878 = vpop.f32.mrf.mxu0
    %1879 = vdwg.mxu0
    %v1880 = vld [vmem:[%s4] sm:$0xf]
    %v1882 = vperm.slane %v1880, 0
    %v1883 = vperm.slane %v1880, 1
    %v1884 = vperm.slane %v1880, 2
    %v1885 = vperm.slane %v1880, 3
    %v1890 = vadd.f32 %v1635, %v1882
    %v1891 = vadd.f32 %v1717, %v1883
    %v1892 = vadd.f32 %v1795, %v1884
    %v1893 = vadd.f32 %v1877, %v1885
    %v1894 = vmax.f32 %v1890, 0.0
    %v1895 = vmax.f32 %v1891, 0.0
    %v1896 = vmax.f32 %v1892, 0.0
    %v1897 = vmax.f32 %v1893, 0.0
    %v1898 = vpack.c.bf16 %v1894, %v1894
    %v1899 = vpack.c.bf16 %v1895, %v1895
    %v1900 = vpack.c.bf16 %v1896, %v1896
    %v1901 = vpack.c.bf16 %v1897, %v1897
    %v1902 = vld [vmem:[%s5] sm:$0xf]
    %v1903 = vld [vmem:[%s5 + $0x4] sm:$0xf]
    %v1904 = vld [vmem:[%s5 + $0x8] sm:$0xf]
    %v1905 = vld [vmem:[%s5 + $0xc] sm:$0xf]
    %v1906 = vld [vmem:[%s5 + $0x10] sm:$0xf]
    %v1907 = vld [vmem:[%s5 + $0x14] sm:$0xf]
    %v1908 = vld [vmem:[%s5 + $0x18] sm:$0xf]
    %v1909 = vld [vmem:[%s5 + $0x1c] sm:$0xf]
    %v1910 = vld [vmem:[%s5 + $0x20] sm:$0xf]
    %v1911 = vld [vmem:[%s5 + $0x24] sm:$0xf]
    %v1912 = vld [vmem:[%s5 + $0x28] sm:$0xf]
    %v1913 = vld [vmem:[%s5 + $0x2c] sm:$0xf]
    %v1914 = vld [vmem:[%s5 + $0x30] sm:$0xf]
    %v1915 = vld [vmem:[%s5 + $0x34] sm:$0xf]
    %v1916 = vld [vmem:[%s5 + $0x38] sm:$0xf]
    %v1917 = vld [vmem:[%s5 + $0x3c] sm:$0xf]
    %v1918 = vld [vmem:[%s5 + $0x40] sm:$0xf]
    %v1919 = vld [vmem:[%s5 + $0x44] sm:$0xf]
    %v1920 = vld [vmem:[%s5 + $0x48] sm:$0xf]
    %v1921 = vld [vmem:[%s5 + $0x4c] sm:$0xf]
    %v1922 = vld [vmem:[%s5 + $0x50] sm:$0xf]
    %v1923 = vld [vmem:[%s5 + $0x54] sm:$0xf]
    %v1924 = vld [vmem:[%s5 + $0x58] sm:$0xf]
    %v1925 = vld [vmem:[%s5 + $0x5c] sm:$0xf]
    %v1926 = vld [vmem:[%s5 + $0x60] sm:$0xf]
    %v1927 = vld [vmem:[%s5 + $0x64] sm:$0xf]
    %v1928 = vld [vmem:[%s5 + $0x68] sm:$0xf]
    %v1929 = vld [vmem:[%s5 + $0x6c] sm:$0xf]
    %v1930 = vld [vmem:[%s5 + $0x70] sm:$0xf]
    %v1931 = vld [vmem:[%s5 + $0x74] sm:$0xf]
    %v1932 = vld [vmem:[%s5 + $0x78] sm:$0xf]
    %v1933 = vld [vmem:[%s5 + $0x7c] sm:$0xf]
    %v1934 = vld [vmem:[%s5 + $0x80] sm:$0xf]
    %v1935 = vld [vmem:[%s5 + $0x84] sm:$0xf]
    %v1936 = vld [vmem:[%s5 + $0x88] sm:$0xf]
    %v1937 = vld [vmem:[%s5 + $0x8c] sm:$0xf]
    %v1938 = vld [vmem:[%s5 + $0x90] sm:$0xf]
    %v1939 = vld [vmem:[%s5 + $0x94] sm:$0xf]
    %v1940 = vld [vmem:[%s5 + $0x98] sm:$0xf]
    %v1941 = vld [vmem:[%s5 + $0x9c] sm:$0xf]
    %v1942 = vld [vmem:[%s5 + $0xa0] sm:$0xf]
    %v1943 = vld [vmem:[%s5 + $0xa4] sm:$0xf]
    %v1944 = vld [vmem:[%s5 + $0xa8] sm:$0xf]
    %v1945 = vld [vmem:[%s5 + $0xac] sm:$0xf]
    %v1946 = vld [vmem:[%s5 + $0xb0] sm:$0xf]
    %v1947 = vld [vmem:[%s5 + $0xb4] sm:$0xf]
    %v1948 = vld [vmem:[%s5 + $0xb8] sm:$0xf]
    %v1949 = vld [vmem:[%s5 + $0xbc] sm:$0xf]
    %v1950 = vld [vmem:[%s5 + $0xc0] sm:$0xf]
    %v1951 = vld [vmem:[%s5 + $0xc4] sm:$0xf]
    %v1952 = vld [vmem:[%s5 + $0xc8] sm:$0xf]
    %v1953 = vld [vmem:[%s5 + $0xcc] sm:$0xf]
    %v1954 = vld [vmem:[%s5 + $0xd0] sm:$0xf]
    %v1955 = vld [vmem:[%s5 + $0xd4] sm:$0xf]
    %v1956 = vld [vmem:[%s5 + $0xd8] sm:$0xf]
    %v1957 = vld [vmem:[%s5 + $0xdc] sm:$0xf]
    %v1958 = vld [vmem:[%s5 + $0xe0] sm:$0xf]
    %v1959 = vld [vmem:[%s5 + $0xe4] sm:$0xf]
    %v1960 = vld [vmem:[%s5 + $0xe8] sm:$0xf]
    %v1961 = vld [vmem:[%s5 + $0xec] sm:$0xf]
    %v1962 = vld [vmem:[%s5 + $0xf0] sm:$0xf]
    %v1963 = vld [vmem:[%s5 + $0xf4] sm:$0xf]
    %v1964 = vld [vmem:[%s5 + $0xf8] sm:$0xf]
    %v1965 = vld [vmem:[%s5 + $0xfc] sm:$0xf]
    %v1966 = vld [vmem:[%s6] sm:$0x1]
    %v1968 = vperm.slane %v1966, 0
    %v2034 = vunpack.c.l.b16 %v1902
    %v2035 = vunpack.c.l.b16 %v1903
    %v2036 = vunpack.c.l.b16 %v1904
    %v2037 = vunpack.c.l.b16 %v1905
    %v2038 = vunpack.c.l.b16 %v1906
    %v2039 = vunpack.c.l.b16 %v1907
    %v2040 = vunpack.c.l.b16 %v1908
    %v2041 = vunpack.c.l.b16 %v1909
    %v2042 = vunpack.c.l.b16 %v1910
    %v2043 = vunpack.c.l.b16 %v1911
    %v2044 = vunpack.c.l.b16 %v1912
    %v2045 = vunpack.c.l.b16 %v1913
    %v2046 = vunpack.c.l.b16 %v1914
    %v2047 = vunpack.c.l.b16 %v1915
    %v2048 = vunpack.c.l.b16 %v1916
    %v2049 = vunpack.c.l.b16 %v1917
    %v2050 = vunpack.c.l.b16 %v1918
    %v2051 = vunpack.c.l.b16 %v1919
    %v2052 = vunpack.c.l.b16 %v1920
    %v2053 = vunpack.c.l.b16 %v1921
    %v2054 = vunpack.c.l.b16 %v1922
    %v2055 = vunpack.c.l.b16 %v1923
    %v2056 = vunpack.c.l.b16 %v1924
    %v2057 = vunpack.c.l.b16 %v1925
    %v2058 = vunpack.c.l.b16 %v1926
    %v2059 = vunpack.c.l.b16 %v1927
    %v2060 = vunpack.c.l.b16 %v1928
    %v2061 = vunpack.c.l.b16 %v1929
    %v2062 = vunpack.c.l.b16 %v1930
    %v2063 = vunpack.c.l.b16 %v1931
    %v2064 = vunpack.c.l.b16 %v1932
    %v2065 = vunpack.c.l.b16 %v1933
    %v2066 = vunpack.c.l.b16 %v1934
    %v2067 = vunpack.c.l.b16 %v1935
    %v2068 = vunpack.c.l.b16 %v1936
    %v2069 = vunpack.c.l.b16 %v1937
    %v2070 = vunpack.c.l.b16 %v1938
    %v2071 = vunpack.c.l.b16 %v1939
    %v2072 = vunpack.c.l.b16 %v1940
    %v2073 = vunpack.c.l.b16 %v1941
    %v2074 = vunpack.c.l.b16 %v1942
    %v2075 = vunpack.c.l.b16 %v1943
    %v2076 = vunpack.c.l.b16 %v1944
    %v2077 = vunpack.c.l.b16 %v1945
    %v2078 = vunpack.c.l.b16 %v1946
    %v2079 = vunpack.c.l.b16 %v1947
    %v2080 = vunpack.c.l.b16 %v1948
    %v2081 = vunpack.c.l.b16 %v1949
    %v2082 = vunpack.c.l.b16 %v1950
    %v2083 = vunpack.c.l.b16 %v1951
    %v2084 = vunpack.c.l.b16 %v1952
    %v2085 = vunpack.c.l.b16 %v1953
    %v2086 = vunpack.c.l.b16 %v1954
    %v2087 = vunpack.c.l.b16 %v1955
    %v2088 = vunpack.c.l.b16 %v1956
    %v2089 = vunpack.c.l.b16 %v1957
    %v2090 = vunpack.c.l.b16 %v1958
    %v2091 = vunpack.c.l.b16 %v1959
    %v2092 = vunpack.c.l.b16 %v1960
    %v2093 = vunpack.c.l.b16 %v1961
    %v2094 = vunpack.c.l.b16 %v1962
    %v2095 = vunpack.c.l.b16 %v1963
    %v2096 = vunpack.c.l.b16 %v1964
    %v2097 = vunpack.c.l.b16 %v1965
    %v2098 = vpack.c.b16 %v2035, %v2034
    %v2099 = vpack.c.b16 %v2037, %v2036
    %v2100 = vpack.c.b16 %v2039, %v2038
    %v2101 = vpack.c.b16 %v2041, %v2040
    %v2102 = vpack.c.b16 %v2043, %v2042
    %v2103 = vpack.c.b16 %v2045, %v2044
    %v2104 = vpack.c.b16 %v2047, %v2046
    %v2105 = vpack.c.b16 %v2049, %v2048
    %v2106 = vpack.c.b16 %v2051, %v2050
    %v2107 = vpack.c.b16 %v2053, %v2052
    %v2108 = vpack.c.b16 %v2055, %v2054
    %v2109 = vpack.c.b16 %v2057, %v2056
    %v2110 = vpack.c.b16 %v2059, %v2058
    %v2111 = vpack.c.b16 %v2061, %v2060
    %v2112 = vpack.c.b16 %v2063, %v2062
    %v2113 = vpack.c.b16 %v2065, %v2064
    %v2114 = vpack.c.b16 %v2067, %v2066
    %v2115 = vpack.c.b16 %v2069, %v2068
    %v2116 = vpack.c.b16 %v2071, %v2070
    %v2117 = vpack.c.b16 %v2073, %v2072
    %v2118 = vpack.c.b16 %v2075, %v2074
    %v2119 = vpack.c.b16 %v2077, %v2076
    %v2120 = vpack.c.b16 %v2079, %v2078
    %v2121 = vpack.c.b16 %v2081, %v2080
    %v2122 = vpack.c.b16 %v2083, %v2082
    %v2123 = vpack.c.b16 %v2085, %v2084
    %v2124 = vpack.c.b16 %v2087, %v2086
    %v2125 = vpack.c.b16 %v2089, %v2088
    %v2126 = vpack.c.b16 %v2091, %v2090
    %v2127 = vpack.c.b16 %v2093, %v2092
    %v2128 = vpack.c.b16 %v2095, %v2094
    %v2129 = vpack.c.b16 %v2097, %v2096
    %2162 = vmatpush.bf16.msra.mxu0 %v2105
    %2163 = vmatpush.bf16.msra.mxu0 %v2104
    %2164 = vmatpush.bf16.msra.mxu0 %v2103
    %2165 = vmatpush.bf16.msra.mxu0 %v2102
    %2166 = vmatpush.bf16.msra.mxu0 %v2101
    %2167 = vmatpush.bf16.msra.mxu0 %v2100
    %2168 = vmatpush.bf16.msra.mxu0 %v2099
    %2169 = vmatpush.bf16.msra.mxu0 %v2098
    %2170 = vmatmul.bf16.gmra.mxu0 %v1898
    %v2171 = vpop.f32.mrf.mxu0
    %v2172 = vadd.f32 %v1968, %v2171
    %v2173 = vpop.f32.mrf.mxu0
    %2174 = vdwg.mxu0
    %2175 = vmatpush.bf16.msra.mxu0 %v2113
    %2176 = vmatpush.bf16.msra.mxu0 %v2112
    %2177 = vmatpush.bf16.msra.mxu0 %v2111
    %2178 = vmatpush.bf16.msra.mxu0 %v2110
    %2179 = vmatpush.bf16.msra.mxu0 %v2109
    %2180 = vmatpush.bf16.msra.mxu0 %v2108
    %2181 = vmatpush.bf16.msra.mxu0 %v2107
    %2182 = vmatpush.bf16.msra.mxu0 %v2106
    %2183 = vmatmul.bf16.gmra.mxu0 %v1899
    %v2184 = vpop.f32.mrf.mxu0
    %v2185 = vadd.f32 %v2172, %v2184
    %v2186 = vpop.f32.mrf.mxu0
    %2187 = vdwg.mxu0
    %2188 = vmatpush.bf16.msra.mxu0 %v2121
    %2189 = vmatpush.bf16.msra.mxu0 %v2120
    %2190 = vmatpush.bf16.msra.mxu0 %v2119
    %2191 = vmatpush.bf16.msra.mxu0 %v2118
    %2192 = vmatpush.bf16.msra.mxu0 %v2117
    %2193 = vmatpush.bf16.msra.mxu0 %v2116
    %2194 = vmatpush.bf16.msra.mxu0 %v2115
    %2195 = vmatpush.bf16.msra.mxu0 %v2114
    %2196 = vmatmul.bf16.gmra.mxu0 %v1900
    %v2197 = vpop.f32.mrf.mxu0
    %v2198 = vadd.f32 %v2185, %v2197
    %v2199 = vpop.f32.mrf.mxu0
    %2200 = vdwg.mxu0
    %2201 = vmatpush.bf16.msra.mxu0 %v2129
    %2202 = vmatpush.bf16.msra.mxu0 %v2128
    %2203 = vmatpush.bf16.msra.mxu0 %v2127
    %2204 = vmatpush.bf16.msra.mxu0 %v2126
    %2205 = vmatpush.bf16.msra.mxu0 %v2125
    %2206 = vmatpush.bf16.msra.mxu0 %v2124
    %2207 = vmatpush.bf16.msra.mxu0 %v2123
    %2208 = vmatpush.bf16.msra.mxu0 %v2122
    %2209 = vmatmul.bf16.gmra.mxu0 %v1901
    %v2210 = vpop.f32.mrf.mxu0
    %v2211 = vadd.f32 %v2198, %v2210
    %v2212 = vpop.f32.mrf.mxu0
    %2213 = vdwg.mxu0
    %vm2214 = vcmask 64512
    %2215 = vst.msk [vmem:[#allocation7] sm:$0xff] %vm2214, %v2211
    // Predicated region
    $region38: #{tpu_custom_call.1} parent=1 // pred_check
      _
    $region39: #{tpu_custom_call.1} parent=1 // pred_check_branch
      %2217 = sbr.rel (0) target = $region41
    $region40: #{tpu_custom_call.1} parent=1 // pred_region
      %2219 = vsyncadd [#allocation4], 0
      %s2221 = sshll.u32 [#allocation7], 4
      %s2222 = int_to_ptr.vmem [resolvable:$true] %s2221
      %s2223 = sshll.u32 %s7, 4
      %s2224 = int_to_ptr.hbm [resolvable:$true] %s2223
      %2226 = dma.vmem_to_hbm [thread:$0]  %s2222, 128, %s2224, [#allocation4]
    $region41: #{tpu_custom_call.1} parent=1 // pred_fallthru
      _
    // Predicated region
    $region42: #{tpu_custom_call.1} parent=1 // pred_check
      _
    $region43: #{tpu_custom_call.1} parent=1 // pred_check_branch
      %2228 = sbr.rel (0) target = $region45
    $region44: #{tpu_custom_call.1} parent=1 // pred_region
      %2230 = dma.done [#allocation4], 128
    $region45: #{tpu_custom_call.1} parent=1 // pred_fallthru
      _
    %2231 = vsyncpa [#allocation3], 1
    %2232 = vsyncpa [#allocation6], 1
    %2233 = vsyncpa [#allocation4], 1

</llo_original>
